<compile_context>
chip_gen: v7x
topology: tpu7x:2x2x1
jax: 0.10.0
libtpu: 0.0.40
codegen_flags: <defaults>
</compile_context>

<pallas_src>
import functools

import jax
import jax.numpy as jnp
from jax.experimental import pallas as pl
from jax.experimental.pallas import tpu as pltpu

_LANE = 128
_SUB = 8


def _round_up(n, m):
    return ((n + m - 1) // m) * m


def _vmem_limit_bytes():
    cap = 64 * 1024 * 1024  # safe default (v7x physical)
    try:
        info_cap = int(pltpu.get_tpu_info().vmem_capacity_bytes)
        if info_cap > 0:
            cap = info_cap
    except Exception:
        pass
    return min(int(cap * 3 // 4), 100 * 1024 * 1024)


_VMEM_LIMIT = _vmem_limit_bytes()


def _plan_tiles(T, Bp, E, Hp, vmem_limit, cap=128):
    """Pick the time tile tt and padded length Tp = tt * nblk from a VMEM budget."""
    # bytes of streamed blocks (+ gate scratch) per time step, worst kernel
    per_t = Bp * (16 * max(E, Hp) + 8 * Hp + 32 * Hp)
    budget = max(vmem_limit // 3, 1 << 20)
    tt_cap = int(max(1, min(cap, budget // max(per_t, 1))))
    nblk = -(-T // tt_cap)          # ceil
    tt = -(-T // nblk)              # ceil -> tt <= tt_cap, padding < nblk steps
    return tt, nblk, tt * nblk


# ----------------------------- Pallas kernels -----------------------------

def _lstm_steps(slen_ref, whh_ref, gxf_scr, gxb_scr, h_scr, c_scr,
                outf_ref, outb_ref, *, tt, Bp, Hp, Tp):
    """Shared fused-direction LSTM recurrence over one time block."""
    i = pl.program_id(0)
    G = 4 * Hp

    @pl.when(i == 0)
    def _():
        h_scr[...] = jnp.zeros_like(h_scr)
        c_scr[...] = jnp.zeros_like(c_scr)

    slen = slen_ref[...]                                    # [Bp, 1] int32

    @pl.loop(0, tt)
    def _(s):
        t_f = i * tt + s                                    # forward absolute time
        t_b = Tp - 1 - t_f                                  # backward absolute time
        rf = pl.multiple_of(s * Bp, 8)
        rb = pl.multiple_of((tt - 1 - s) * Bp, 8)

        h = h_scr[...]                                      # [Bp, 2Hp] = [h_f | h_b]
        c = c_scr[...]
        gh = jnp.dot(h.astype(jnp.bfloat16), whh_ref[...],
                     preferred_element_type=jnp.float32)    # [Bp, 8Hp]
        gf = gxf_scr[pl.ds(rf, Bp), :] + gh[:, :G]
        gb = gxb_scr[pl.ds(rb, Bp), :] + gh[:, G:]

        def cell(g, c_old):                                 # gate order i, f, g, o
            i_g = jax.nn.sigmoid(g[:, 0 * Hp:1 * Hp])
            f_g = jax.nn.sigmoid(g[:, 1 * Hp:2 * Hp])
            g_g = jnp.tanh(g[:, 2 * Hp:3 * Hp])
            o_g = jax.nn.sigmoid(g[:, 3 * Hp:4 * Hp])
            c_new = f_g * c_old + i_g * g_g
            return o_g * jnp.tanh(c_new), c_new

        hf_new, cf_new = cell(gf, c[:, :Hp])
        hb_new, cb_new = cell(gb, c[:, Hp:])

        mf = slen > t_f                                     # [Bp, 1] bool
        mb = slen > t_b
        zero = jnp.zeros_like(hf_new)
        outf_ref[pl.ds(rf, Bp), :] = jnp.where(mf, hf_new, zero).astype(outf_ref.dtype)
        outb_ref[pl.ds(rb, Bp), :] = jnp.where(mb, hb_new, zero).astype(outb_ref.dtype)
        # pack_padded semantics: freeze the state where the position is padding
        h_scr[:, :Hp] = jnp.where(mf, hf_new, h[:, :Hp])
        c_scr[:, :Hp] = jnp.where(mf, cf_new, c[:, :Hp])
        h_scr[:, Hp:] = jnp.where(mb, hb_new, h[:, Hp:])
        c_scr[:, Hp:] = jnp.where(mb, cb_new, c[:, Hp:])


def _bilstm0_kernel(slen_ref, xf_ref, xb_ref, g_ref, be_ref,
                    wihf_ref, bihf_ref, wihb_ref, bihb_ref, whh_ref,
                    outf_ref, outb_ref,
                    gxf_scr, gxb_scr, h_scr, c_scr, *, tt, Bp, Hp, Tp, eps):
    # LayerNorm1 + per-direction input projection fused in front of the recurrence.
    def ln_proj(x, w_ref, b_ref):
        mu = jnp.mean(x, axis=-1, keepdims=True)
        var = jnp.mean((x - mu) ** 2, axis=-1, keepdims=True)
        y = (x - mu) * jax.lax.rsqrt(var + eps) * g_ref[...] + be_ref[...]
        return (jnp.dot(y.astype(jnp.bfloat16), w_ref[...],
                        preferred_element_type=jnp.float32) + b_ref[...])

    gxf_scr[...] = ln_proj(xf_ref[...], wihf_ref, bihf_ref)
    gxb_scr[...] = ln_proj(xb_ref[...], wihb_ref, bihb_ref)
    _lstm_steps(slen_ref, whh_ref, gxf_scr, gxb_scr, h_scr, c_scr,
                outf_ref, outb_ref, tt=tt, Bp=Bp, Hp=Hp, Tp=Tp)


def _bilstm1_kernel(slen_ref, af_ref, bf_ref, ar_ref, br_ref,
                    wihf_ref, bihf_ref, wihb_ref, bihb_ref, whh_ref,
                    outf_ref, outb_ref,
                    gxf_scr, gxb_scr, h_scr, c_scr, *, tt, Bp, Hp, Tp):
    # Layer-1 input projection fused: input is [h1_f | h1_b] (bf16, lane aligned).
    xin_f = jnp.concatenate([af_ref[...], bf_ref[...]], axis=-1)
    gxf_scr[...] = (jnp.dot(xin_f, wihf_ref[...],
                            preferred_element_type=jnp.float32) + bihf_ref[...])
    xin_b = jnp.concatenate([ar_ref[...], br_ref[...]], axis=-1)
    gxb_scr[...] = (jnp.dot(xin_b, wihb_ref[...],
                            preferred_element_type=jnp.float32) + bihb_ref[...])
    _lstm_steps(slen_ref, whh_ref, gxf_scr, gxb_scr, h_scr, c_scr,
                outf_ref, outb_ref, tt=tt, Bp=Bp, Hp=Hp, Tp=Tp)


def _head_viterbi_kernel(slen_ref, hf_ref, hb_ref, w1f_ref, w1b_ref, b1_ref,
                         g2_ref, be2_ref, w2_ref, b2_ref, transT_ref,
                         vpath_ref, vscore_ref, logit_scr,
                         *, tt, Bp, Nc8, Np, eps):
    blk = pl.program_id(0)

    # ---- fused classifier head for this time block (Linear1 -> LN2 -> LeakyReLU
    # -> Dropout(=identity in eval) -> Linear2) ----
    z = (jnp.dot(hf_ref[...], w1f_ref[...], preferred_element_type=jnp.float32)
         + jnp.dot(hb_ref[...], w1b_ref[...], preferred_element_type=jnp.float32)
         + b1_ref[...])
    mu = jnp.mean(z, axis=-1, keepdims=True)
    var = jnp.mean((z - mu) ** 2, axis=-1, keepdims=True)
    z = (z - mu) * jax.lax.rsqrt(var + eps) * g2_ref[...] + be2_ref[...]
    z = jnp.where(z >= 0.0, z, 0.01 * z)                      # LeakyReLU (slope 0.01)
    logit_scr[...] = (jnp.dot(z.astype(jnp.bfloat16), w2_ref[...],
                              preferred_element_type=jnp.float32) + b2_ref[...])

    # ---- CRF viterbi forward DP (include_start_end_trans=False, no constraints).
    # Emission logit is added AFTER the max (it is constant along the source axis),
    # so the per-step [Bp, Nc8, Np] work is a single add + max/argmax.
    slen = slen_ref[...]                                      # [Bp, 1] int32
    transT_b = transT_ref[...][None, :, :]                    # [1, Nc8, Np]
    iota_np = jax.lax.broadcasted_iota(jnp.int32, (1, 1, Np), 2)
    iota_2d = jax.lax.broadcasted_iota(jnp.int32, (1, Np), 1)

    @pl.loop(0, tt)
    def _(s):
        t = blk * tt + s
        r = pl.multiple_of(s * Bp, 8)
        logit_t = logit_scr[pl.ds(r, Bp), :]                  # [Bp, Nc8]

        @pl.when(t == 0)
        def _():
            vscore_ref[...] = jnp.full((Bp, Np), -1e30, jnp.float32)
            vscore_ref[:, :Nc8] = logit_t
            vpath_ref[s] = jnp.zeros((Bp, Nc8), jnp.int32)

        @pl.when(t > 0)
        def _():
            vscore = vscore_ref[...]                          # [Bp, Np]
            keep = slen > t                                   # [Bp, 1] bool
            score = vscore[:, None, :] + transT_b             # [Bp, Nc8, Np]
            best = jnp.max(score, axis=-1)                    # [Bp, Nc8]
            best_idx = jnp.min(
                jnp.where(score == best[:, :, None], iota_np, Np), axis=-1)
            # masked steps reproduce fastNLP exactly: transitions are zeroed there,
            # so the best previous tag is argmax(vscore) for every current class.
            vbest = jnp.max(vscore, axis=-1, keepdims=True)   # [Bp, 1]
            vidx = jnp.min(jnp.where(vscore == vbest, iota_2d, Np),
                           axis=-1, keepdims=True)            # [Bp, 1]
            vpath_ref[s] = jnp.where(keep, best_idx, vidx).astype(jnp.int32)
            vscore_ref[:, :Nc8] = jnp.where(keep, best + logit_t, vscore[:, :Nc8])


# ----------------------------- wrappers -----------------------------------

def _cparams():
    return pltpu.CompilerParams(dimension_semantics=("arbitrary",),
                                vmem_limit_bytes=_VMEM_LIMIT)


def pallas_bilstm_layer0(x2d, slen, norm_g, norm_b, wihf, bihf, wihb, bihb, whh_bd,
                         *, tt, nblk, Bp, Hp, eps=1e-5):
    Tp = tt * nblk
    E = x2d.shape[1]
    rows_blk = tt * Bp
    G = 4 * Hp
    return pl.pallas_call(
        functools.partial(_bilstm0_kernel, tt=tt, Bp=Bp, Hp=Hp, Tp=Tp, eps=eps),
        grid=(nblk,),
        in_specs=[
            pl.BlockSpec((Bp, 1), lambda i: (0, 0)),                    # seq_len
            pl.BlockSpec((rows_blk, E), lambda i: (i, 0)),              # x, fwd block
            pl.BlockSpec((rows_blk, E), lambda i: (nblk - 1 - i, 0)),   # x, bwd block
            pl.BlockSpec((1, E), lambda i: (0, 0)),                     # LN gamma
            pl.BlockSpec((1, E), lambda i: (0, 0)),                     # LN beta
            pl.BlockSpec((E, G), lambda i: (0, 0)),                     # W_ih fwd
            pl.BlockSpec((1, G), lambda i: (0, 0)),                     # b fwd
            pl.BlockSpec((E, G), lambda i: (0, 0)),                     # W_ih bwd
            pl.BlockSpec((1, G), lambda i: (0, 0)),                     # b bwd
            pl.BlockSpec((2 * Hp, 2 * G), lambda i: (0, 0)),            # W_hh blockdiag
        ],
        out_specs=(pl.BlockSpec((rows_blk, Hp), lambda i: (i, 0)),
                   pl.BlockSpec((rows_blk, Hp), lambda i: (nblk - 1 - i, 0))),
        out_shape=(jax.ShapeDtypeStruct((Tp * Bp, Hp), jnp.bfloat16),
                   jax.ShapeDtypeStruct((Tp * Bp, Hp), jnp.bfloat16)),
        scratch_shapes=[pltpu.VMEM((rows_blk, G), jnp.float32),
                        pltpu.VMEM((rows_blk, G), jnp.float32),
                        pltpu.VMEM((Bp, 2 * Hp), jnp.float32),
                        pltpu.VMEM((Bp, 2 * Hp), jnp.float32)],
        compiler_params=_cparams(),
    )(slen, x2d, x2d, norm_g, norm_b, wihf, bihf, wihb, bihb, whh_bd)


def pallas_bilstm_layer1(hf, hb, slen, wihf, bihf, wihb, bihb, whh_bd,
                         *, tt, nblk, Bp, Hp):
    Tp = tt * nblk
    rows_blk = tt * Bp
    G = 4 * Hp
    return pl.pallas_call(
        functools.partial(_bilstm1_kernel, tt=tt, Bp=Bp, Hp=Hp, Tp=Tp),
        grid=(nblk,),
        in_specs=[
            pl.BlockSpec((Bp, 1), lambda i: (0, 0)),                    # seq_len
            pl.BlockSpec((rows_blk, Hp), lambda i: (i, 0)),             # h1_f, fwd blk
            pl.BlockSpec((rows_blk, Hp), lambda i: (i, 0)),             # h1_b, fwd blk
            pl.BlockSpec((rows_blk, Hp), lambda i: (nblk - 1 - i, 0)),  # h1_f, bwd blk
            pl.BlockSpec((rows_blk, Hp), lambda i: (nblk - 1 - i, 0)),  # h1_b, bwd blk
            pl.BlockSpec((2 * Hp, G), lambda i: (0, 0)),
            pl.BlockSpec((1, G), lambda i: (0, 0)),
            pl.BlockSpec((2 * Hp, G), lambda i: (0, 0)),
            pl.BlockSpec((1, G), lambda i: (0, 0)),
            pl.BlockSpec((2 * Hp, 2 * G), lambda i: (0, 0)),
        ],
        out_specs=(pl.BlockSpec((rows_blk, Hp), lambda i: (i, 0)),
                   pl.BlockSpec((rows_blk, Hp), lambda i: (nblk - 1 - i, 0))),
        out_shape=(jax.ShapeDtypeStruct((Tp * Bp, Hp), jnp.bfloat16),
                   jax.ShapeDtypeStruct((Tp * Bp, Hp), jnp.bfloat16)),
        scratch_shapes=[pltpu.VMEM((rows_blk, G), jnp.float32),
                        pltpu.VMEM((rows_blk, G), jnp.float32),
                        pltpu.VMEM((Bp, 2 * Hp), jnp.float32),
                        pltpu.VMEM((Bp, 2 * Hp), jnp.float32)],
        compiler_params=_cparams(),
    )(slen, hf, hb, hf, hb, wihf, bihf, wihb, bihb, whh_bd)


def pallas_head_viterbi(hf, hb, slen, w1f, w1b, b1, g2, be2, w2, b2, transT,
                        *, tt, nblk, Bp, Hp, eps=1e-5):
    Tp = tt * nblk
    rows_blk = tt * Bp
    F = w1f.shape[1]
    Nc8 = w2.shape[1]
    Np = transT.shape[1]
    return pl.pallas_call(
        functools.partial(_head_viterbi_kernel, tt=tt, Bp=Bp, Nc8=Nc8, Np=Np, eps=eps),
        grid=(nblk,),
        in_specs=[
            pl.BlockSpec((Bp, 1), lambda i: (0, 0)),
            pl.BlockSpec((rows_blk, Hp), lambda i: (i, 0)),
            pl.BlockSpec((rows_blk, Hp), lambda i: (i, 0)),
            pl.BlockSpec((Hp, F), lambda i: (0, 0)),
            pl.BlockSpec((Hp, F), lambda i: (0, 0)),
            pl.BlockSpec((1, F), lambda i: (0, 0)),
            pl.BlockSpec((1, F), lambda i: (0, 0)),
            pl.BlockSpec((1, F), lambda i: (0, 0)),
            pl.BlockSpec((F, Nc8), lambda i: (0, 0)),
            pl.BlockSpec((1, Nc8), lambda i: (0, 0)),
            pl.BlockSpec((Nc8, Np), lambda i: (0, 0)),
        ],
        out_specs=(pl.BlockSpec((tt, Bp, Nc8), lambda i: (i, 0, 0)),
                   pl.BlockSpec((Bp, Np), lambda i: (0, 0))),
        out_shape=(jax.ShapeDtypeStruct((Tp, Bp, Nc8), jnp.int32),
                   jax.ShapeDtypeStruct((Bp, Np), jnp.float32)),
        scratch_shapes=[pltpu.VMEM((rows_blk, Nc8), jnp.float32)],
        compiler_params=_cparams(),
    )(slen, hf, hb, w1f, w1b, b1, g2, be2, w2, b2, transT)


# ----------------------------- forward -------------------------------------

def adv_seq_label_forward(packed, words, seq_len):
    """Prediction path of AdvSeqLabel.forward (target=None); dropout is identity."""
    B, T = words.shape
    Hp, N, Nc8 = packed["Hp"], packed["N"], packed["Nc8"]
    E = packed["embedding"].shape[1]
    Bp = _round_up(B, _SUB)
    tt, nblk, Tp = _plan_tiles(T, Bp, E, Hp, _VMEM_LIMIT)

    # time-major; batch and time padded for tiling (padded entries are masked out).
    words_tb = jnp.zeros((Tp, Bp), words.dtype).at[:T, :B].set(words.T)
    slen = jnp.zeros((Bp, 1), jnp.int32).at[:B, 0].set(seq_len.astype(jnp.int32))

    # Embedding gather stays in plain JAX.
    # TODO(synk): fuse the gather into the layer-0 kernel via a manual DMA gather.
    x = packed["embedding"][words_tb].reshape(Tp * Bp, E)

    h1f, h1b = pallas_bilstm_layer0(
        x, slen, packed["norm1_g"], packed["norm1_b"],
        packed["l0_wih_f"], packed["l0_b_f"], packed["l0_wih_b"], packed["l0_b_b"],
        packed["l0_whh"], tt=tt, nblk=nblk, Bp=Bp, Hp=Hp)

    h2f, h2b = pallas_bilstm_layer1(
        h1f, h1b, slen,
        packed["l1_wih_f"], packed["l1_b_f"], packed["l1_wih_b"], packed["l1_b_b"],
        packed["l1_whh"], tt=tt, nblk=nblk, Bp=Bp, Hp=Hp)

    vpath, vscore = pallas_head_viterbi(
        h2f, h2b, slen,
        packed["linear1_wf"], packed["linear1_wb"], packed["linear1_b"],
        packed["norm2_g"], packed["norm2_b"],
        packed["linear2_w"], packed["linear2_b"], packed["crf_transT"],
        tt=tt, nblk=nblk, Bp=Bp, Hp=Hp)

    vpath = vpath[:, :B]        # [Tp, B, Nc8]
    vscore = vscore[:B]         # [B, Np]

    # TODO(synk): viterbi backtrace (per-example sequential gather chain) stays in
    # plain JAX as a single lax.scan, mirroring fastNLP's viterbi_decode.
    lens = seq_len.astype(jnp.int32) - 1
    idxes = (lens[None, :] - jnp.arange(T, dtype=jnp.int32)[:, None]) % T  # [T, B]
    batch_idx = jnp.arange(B)
    last_tags = jnp.argmax(vscore[:, :N], axis=1).astype(jnp.int32)
    ans0 = jnp.zeros((T, B), jnp.int32).at[idxes[0], batch_idx].set(last_tags)

    def bt_step(carry, i):
        ans, last = carry
        last = vpath[idxes[i], batch_idx, last]
        ans = ans.at[idxes[i + 1], batch_idx].set(last)
        return (ans, last), None

    (ans, _), _ = jax.lax.scan(bt_step, (ans0, last_tags),
                               jnp.arange(T - 1, dtype=jnp.int32))
    return {"pred": ans.T}


# ----------------------------- params --------------------------------------

def init_params(key, vocab, E, H, N):
    ks = jax.random.split(key, 18)

    def nrm(k, shape, scale=0.1):
        return (scale * jax.random.normal(k, shape)).astype(jnp.float32)

    D2 = 2 * H
    F = D2 // 3
    return {
        "embedding": nrm(ks[0], (vocab, E)),
        "norm1_g": jnp.ones((E,), jnp.float32),
        "norm1_b": jnp.zeros((E,), jnp.float32),
        # LSTM weights stored as (W_ih^T [D,4H], W_hh^T [H,4H], b_ih+b_hh [4H])
        "lstm0_f": (nrm(ks[1], (E, 4 * H)), nrm(ks[2], (H, 4 * H)), nrm(ks[3], (4 * H,))),
        "lstm0_b": (nrm(ks[4], (E, 4 * H)), nrm(ks[5], (H, 4 * H)), nrm(ks[6], (4 * H,))),
        "lstm1_f": (nrm(ks[7], (D2, 4 * H)), nrm(ks[8], (H, 4 * H)), nrm(ks[9], (4 * H,))),
        "lstm1_b": (nrm(ks[10], (D2, 4 * H)), nrm(ks[11], (H, 4 * H)), nrm(ks[12], (4 * H,))),
        "linear1_w": nrm(ks[13], (D2, F)),
        "linear1_b": nrm(ks[14], (F,)),
        "norm2_g": jnp.ones((F,), jnp.float32),
        "norm2_b": jnp.zeros((F,), jnp.float32),
        "linear2_w": nrm(ks[15], (F, N)),
        "linear2_b": nrm(ks[16], (N,)),
        "crf_trans": nrm(ks[17], (N, N)),
    }


def _pad_gate_blocks(w, H, Hp):
    """Pad each of the 4 gate blocks along the last axis from H to Hp columns."""
    parts = jnp.split(w, 4, axis=-1)
    pad = [(0, 0)] * (w.ndim - 1) + [(0, Hp - H)]
    return jnp.concatenate([jnp.pad(p, pad) for p in parts], axis=-1)


def _pad_dir_rows(w, H, Hp):
    """Rows laid out as [fwd H | bwd H] -> [fwd Hp | bwd Hp] (zero pad rows)."""
    wf, wb = jnp.split(w, 2, axis=0)
    pad = [(0, Hp - H)] + [(0, 0)] * (w.ndim - 1)
    return jnp.concatenate([jnp.pad(wf, pad), jnp.pad(wb, pad)], axis=0)


def pack_params(p, H, N):
    """Pad/stack logical params into the lane-aligned layout the kernels consume."""
    Hp = _round_up(H, _LANE)
    Nc8 = _round_up(N, _SUB)          # current-class axis: sublane padding only
    Np = _round_up(N, _LANE)          # source/reduction axis: lane padding
    E = p["embedding"].shape[1]
    F = p["linear1_w"].shape[1]

    def pack_layer(pf, pb, bidir_input):
        wih_f, whh_f, b_f = pf
        wih_b, whh_b, b_b = pb
        if bidir_input:  # layer-1 input rows follow the padded [fwd Hp | bwd Hp] layout
            wih_f = _pad_dir_rows(wih_f, H, Hp)
            wih_b = _pad_dir_rows(wih_b, H, Hp)
        wih_f = _pad_gate_blocks(wih_f, H, Hp).astype(jnp.bfloat16)
        wih_b = _pad_gate_blocks(wih_b, H, Hp).astype(jnp.bfloat16)
        bias_f = _pad_gate_blocks(b_f.reshape(1, -1), H, Hp).astype(jnp.float32)
        bias_b = _pad_gate_blocks(b_b.reshape(1, -1), H, Hp).astype(jnp.float32)
        whh_f = jnp.pad(_pad_gate_blocks(whh_f, H, Hp), ((0, Hp - H), (0, 0)))
        whh_b = jnp.pad(_pad_gate_blocks(whh_b, H, Hp), ((0, Hp - H), (0, 0)))
        z = jnp.zeros((Hp, 4 * Hp), jnp.float32)
        whh_bd = jnp.concatenate(
            [jnp.concatenate([whh_f, z], axis=1),
             jnp.concatenate([z, whh_b], axis=1)], axis=0).astype(jnp.bfloat16)
        return wih_f, bias_f, wih_b, bias_b, whh_bd

    l0w_f, l0b_f, l0w_b, l0b_b, l0whh = pack_layer(p["lstm0_f"], p["lstm0_b"], False)
    l1w_f, l1b_f, l1w_b, l1b_b, l1whh = pack_layer(p["lstm1_f"], p["lstm1_b"], True)

    w1f = jnp.pad(p["linear1_w"][:H], ((0, Hp - H), (0, 0))).astype(jnp.bfloat16)
    w1b = jnp.pad(p["linear1_w"][H:], ((0, Hp - H), (0, 0))).astype(jnp.bfloat16)
    w2 = jnp.pad(p["linear2_w"], ((0, 0), (0, Nc8 - N))).astype(jnp.bfloat16)
    # pad classes get a very negative bias so they can never win the viterbi max
    b2 = jnp.concatenate([p["linear2_b"],
                          jnp.full((Nc8 - N,), -1e30, jnp.float32)]).reshape(1, Nc8)
    transT = jnp.pad(p["crf_trans"].T, ((0, Nc8 - N), (0, Np - N)))

    return {
        "embedding": p["embedding"],
        "norm1_g": p["norm1_g"].reshape(1, E),
        "norm1_b": p["norm1_b"].reshape(1, E),
        "l0_wih_f": l0w_f, "l0_b_f": l0b_f, "l0_wih_b": l0w_b, "l0_b_b": l0b_b,
        "l0_whh": l0whh,
        "l1_wih_f": l1w_f, "l1_b_f": l1b_f, "l1_wih_b": l1w_b, "l1_b_b": l1b_b,
        "l1_whh": l1whh,
        "linear1_wf": w1f, "linear1_wb": w1b,
        "linear1_b": p["linear1_b"].reshape(1, F),
        "norm2_g": p["norm2_g"].reshape(1, F),
        "norm2_b": p["norm2_b"].reshape(1, F),
        "linear2_w": w2,
        "linear2_b": b2,
        "crf_transT": transT,
        "H": H, "Hp": Hp, "N": N, "Nc8": Nc8, "Np": Np,
    }


if __name__ == "__main__":
    VOCAB, E, H, NUM_CLASSES = 50, 32, 48, 8   # hidden*2//3 = 32
    B, T = 2, 8

    key = jax.random.PRNGKey(0)
    k_words, _ = jax.random.split(key)
    words = jax.random.randint(k_words, (B, T), 0, VOCAB, dtype=jnp.int32)
    seq_len = jnp.array([T, T - 3], dtype=jnp.int32)

    params = init_params(jax.random.PRNGKey(1), VOCAB, E, H, NUM_CLASSES)
    packed = pack_params(params, H, NUM_CLASSES)

    out = adv_seq_label_forward(packed, words, seq_len)
    pred = jax.block_until_ready(out["pred"])
    assert pred.shape == (B, T) and pred.dtype == jnp.int32
    assert int(pred.min()) >= 0 and int(pred.max()) < NUM_CLASSES
    print("KERNEL_OK")
</pallas_src>

<mosaic_0001>
module attributes {stable_mosaic.version = 11 : i64} {
  func.func @_bilstm0_kernel(%arg0: i32, %arg1: memref<8x1xi32, #tpu.memory_space<vmem>>, %arg2: memref<64x32xf32, #tpu.memory_space<vmem>>, %arg3: memref<64x32xf32, #tpu.memory_space<vmem>>, %arg4: memref<1x32xf32, #tpu.memory_space<vmem>>, %arg5: memref<1x32xf32, #tpu.memory_space<vmem>>, %arg6: memref<32x512xbf16, #tpu.memory_space<vmem>>, %arg7: memref<1x512xf32, #tpu.memory_space<vmem>>, %arg8: memref<32x512xbf16, #tpu.memory_space<vmem>>, %arg9: memref<1x512xf32, #tpu.memory_space<vmem>>, %arg10: memref<256x1024xbf16, #tpu.memory_space<vmem>>, %arg11: memref<64x128xbf16, #tpu.memory_space<vmem>>, %arg12: memref<64x128xbf16, #tpu.memory_space<vmem>>, %arg13: memref<64x512xf32, #tpu.memory_space<vmem>>, %arg14: memref<64x512xf32, #tpu.memory_space<vmem>>, %arg15: memref<8x256xf32, #tpu.memory_space<vmem>>, %arg16: memref<8x256xf32, #tpu.memory_space<vmem>>) attributes {dimension_semantics = [#tpu.dimension_semantics<arbitrary>], iteration_bounds = array<i64: 1>, scalar_prefetch = 0 : i64, scratch_operands = 4 : i64, tpu.core_type = #tpu.core_type<tc>, window_params = [{pipeline_mode = #tpu.pipeline_mode<synchronous>, transform_indices = @transform_0, window_bounds = array<i64: 8, 1>}, {transform_indices = @transform_1, window_bounds = array<i64: 64, 32>}, {transform_indices = @transform_2, window_bounds = array<i64: 64, 32>}, {pipeline_mode = #tpu.pipeline_mode<synchronous>, transform_indices = @transform_3, window_bounds = array<i64: 1, 32>}, {pipeline_mode = #tpu.pipeline_mode<synchronous>, transform_indices = @transform_4, window_bounds = array<i64: 1, 32>}, {pipeline_mode = #tpu.pipeline_mode<synchronous>, transform_indices = @transform_5, window_bounds = array<i64: 32, 512>}, {pipeline_mode = #tpu.pipeline_mode<synchronous>, transform_indices = @transform_6, window_bounds = array<i64: 1, 512>}, {pipeline_mode = #tpu.pipeline_mode<synchronous>, transform_indices = @transform_7, window_bounds = array<i64: 32, 512>}, {pipeline_mode = #tpu.pipeline_mode<synchronous>, transform_indices = @transform_8, window_bounds = array<i64: 1, 512>}, {pipeline_mode = #tpu.pipeline_mode<synchronous>, transform_indices = @transform_9, window_bounds = array<i64: 256, 1024>}, {transform_indices = @transform_10, window_bounds = array<i64: 64, 128>}, {transform_indices = @transform_11, window_bounds = array<i64: 64, 128>}]} {
    %c0 = arith.constant 0 : index
    %c0_0 = arith.constant 0 : index
    %0 = vector.load %arg2[%c0, %c0_0] : memref<64x32xf32, #tpu.memory_space<vmem>>, vector<64x32xf32>
    %cst = arith.constant dense<0.000000e+00> : vector<64xf32>
    %1 = vector.multi_reduction <add>, %0, %cst [1] : vector<64x32xf32> to vector<64xf32>
    %2 = vector.shape_cast %1 : vector<64xf32> to vector<64x1xf32>
    %cst_1 = arith.constant 3.200000e+01 : f32
    %3 = vector.broadcast %cst_1 : f32 to vector<64x1xf32>
    %4 = arith.divf %2, %3 : vector<64x1xf32>
    %5 = vector.broadcast %4 : vector<64x1xf32> to vector<64x32xf32>
    %6 = arith.subf %0, %5 : vector<64x32xf32>
    %7 = arith.mulf %6, %6 : vector<64x32xf32>
    %cst_2 = arith.constant dense<0.000000e+00> : vector<64xf32>
    %8 = vector.multi_reduction <add>, %7, %cst_2 [1] : vector<64x32xf32> to vector<64xf32>
    %9 = vector.shape_cast %8 : vector<64xf32> to vector<64x1xf32>
    %cst_3 = arith.constant 3.200000e+01 : f32
    %10 = vector.broadcast %cst_3 : f32 to vector<64x1xf32>
    %11 = arith.divf %9, %10 : vector<64x1xf32>
    %12 = vector.broadcast %4 : vector<64x1xf32> to vector<64x32xf32>
    %13 = arith.subf %0, %12 : vector<64x32xf32>
    %cst_4 = arith.constant 9.99999974E-6 : f32
    %14 = vector.broadcast %cst_4 : f32 to vector<64x1xf32>
    %15 = arith.addf %11, %14 : vector<64x1xf32>
    %16 = math.rsqrt %15 : vector<64x1xf32>
    %17 = vector.broadcast %16 : vector<64x1xf32> to vector<64x32xf32>
    %18 = arith.mulf %13, %17 : vector<64x32xf32>
    %c0_5 = arith.constant 0 : index
    %c0_6 = arith.constant 0 : index
    %19 = vector.load %arg4[%c0_5, %c0_6] : memref<1x32xf32, #tpu.memory_space<vmem>>, vector<1x32xf32>
    %20 = vector.broadcast %19 : vector<1x32xf32> to vector<64x32xf32>
    %21 = arith.mulf %18, %20 : vector<64x32xf32>
    %c0_7 = arith.constant 0 : index
    %c0_8 = arith.constant 0 : index
    %22 = vector.load %arg5[%c0_7, %c0_8] : memref<1x32xf32, #tpu.memory_space<vmem>>, vector<1x32xf32>
    %23 = vector.broadcast %22 : vector<1x32xf32> to vector<64x32xf32>
    %24 = arith.addf %21, %23 : vector<64x32xf32>
    %25 = arith.truncf %24 : vector<64x32xf32> to vector<64x32xbf16>
    %c0_9 = arith.constant 0 : index
    %c0_10 = arith.constant 0 : index
    %26 = vector.load %arg6[%c0_9, %c0_10] : memref<32x512xbf16, #tpu.memory_space<vmem>>, vector<32x512xbf16>
    %cst_11 = arith.constant dense<0.000000e+00> : vector<64x512xf32>
    %27 = tpu.matmul %25, %26, %cst_11 {dimension_numbers = #tpu.dot_dimension_numbers<[1], [0], [0], [1], [0, 0, 1, 1], [], []>} : vector<64x32xbf16>, vector<32x512xbf16>, vector<64x512xf32> -> vector<64x512xf32>
    %c0_12 = arith.constant 0 : index
    %c0_13 = arith.constant 0 : index
    %28 = vector.load %arg7[%c0_12, %c0_13] : memref<1x512xf32, #tpu.memory_space<vmem>>, vector<1x512xf32>
    %29 = vector.broadcast %28 : vector<1x512xf32> to vector<64x512xf32>
    %30 = arith.addf %27, %29 : vector<64x512xf32>
    %c0_14 = arith.constant 0 : index
    %c0_15 = arith.constant 0 : index
    %31 = vector.load %arg13[%c0_14, %c0_15] : memref<64x512xf32, #tpu.memory_space<vmem>>, vector<64x512xf32>
    tpu.vector_store %arg13[%c0_14, %c0_15], %30 {strides = array<i32>} : memref<64x512xf32, #tpu.memory_space<vmem>>, vector<64x512xf32>,
    %c0_16 = arith.constant 0 : index
    %c0_17 = arith.constant 0 : index
    %32 = vector.load %arg3[%c0_16, %c0_17] : memref<64x32xf32, #tpu.memory_space<vmem>>, vector<64x32xf32>
    %cst_18 = arith.constant dense<0.000000e+00> : vector<64xf32>
    %33 = vector.multi_reduction <add>, %32, %cst_18 [1] : vector<64x32xf32> to vector<64xf32>
    %34 = vector.shape_cast %33 : vector<64xf32> to vector<64x1xf32>
    %cst_19 = arith.constant 3.200000e+01 : f32
    %35 = vector.broadcast %cst_19 : f32 to vector<64x1xf32>
    %36 = arith.divf %34, %35 : vector<64x1xf32>
    %37 = vector.broadcast %36 : vector<64x1xf32> to vector<64x32xf32>
    %38 = arith.subf %32, %37 : vector<64x32xf32>
    %39 = arith.mulf %38, %38 : vector<64x32xf32>
    %cst_20 = arith.constant dense<0.000000e+00> : vector<64xf32>
    %40 = vector.multi_reduction <add>, %39, %cst_20 [1] : vector<64x32xf32> to vector<64xf32>
    %41 = vector.shape_cast %40 : vector<64xf32> to vector<64x1xf32>
    %cst_21 = arith.constant 3.200000e+01 : f32
    %42 = vector.broadcast %cst_21 : f32 to vector<64x1xf32>
    %43 = arith.divf %41, %42 : vector<64x1xf32>
    %44 = vector.broadcast %36 : vector<64x1xf32> to vector<64x32xf32>
    %45 = arith.subf %32, %44 : vector<64x32xf32>
    %cst_22 = arith.constant 9.99999974E-6 : f32
    %46 = vector.broadcast %cst_22 : f32 to vector<64x1xf32>
    %47 = arith.addf %43, %46 : vector<64x1xf32>
    %48 = math.rsqrt %47 : vector<64x1xf32>
    %49 = vector.broadcast %48 : vector<64x1xf32> to vector<64x32xf32>
    %50 = arith.mulf %45, %49 : vector<64x32xf32>
    %c0_23 = arith.constant 0 : index
    %c0_24 = arith.constant 0 : index
    %51 = vector.load %arg4[%c0_23, %c0_24] : memref<1x32xf32, #tpu.memory_space<vmem>>, vector<1x32xf32>
    %52 = vector.broadcast %51 : vector<1x32xf32> to vector<64x32xf32>
    %53 = arith.mulf %50, %52 : vector<64x32xf32>
    %c0_25 = arith.constant 0 : index
    %c0_26 = arith.constant 0 : index
    %54 = vector.load %arg5[%c0_25, %c0_26] : memref<1x32xf32, #tpu.memory_space<vmem>>, vector<1x32xf32>
    %55 = vector.broadcast %54 : vector<1x32xf32> to vector<64x32xf32>
    %56 = arith.addf %53, %55 : vector<64x32xf32>
    %57 = arith.truncf %56 : vector<64x32xf32> to vector<64x32xbf16>
    %c0_27 = arith.constant 0 : index
    %c0_28 = arith.constant 0 : index
    %58 = vector.load %arg8[%c0_27, %c0_28] : memref<32x512xbf16, #tpu.memory_space<vmem>>, vector<32x512xbf16>
    %cst_29 = arith.constant dense<0.000000e+00> : vector<64x512xf32>
    %59 = tpu.matmul %57, %58, %cst_29 {dimension_numbers = #tpu.dot_dimension_numbers<[1], [0], [0], [1], [0, 0, 1, 1], [], []>} : vector<64x32xbf16>, vector<32x512xbf16>, vector<64x512xf32> -> vector<64x512xf32>
    %c0_30 = arith.constant 0 : index
    %c0_31 = arith.constant 0 : index
    %60 = vector.load %arg9[%c0_30, %c0_31] : memref<1x512xf32, #tpu.memory_space<vmem>>, vector<1x512xf32>
    %61 = vector.broadcast %60 : vector<1x512xf32> to vector<64x512xf32>
    %62 = arith.addf %59, %61 : vector<64x512xf32>
    %c0_32 = arith.constant 0 : index
    %c0_33 = arith.constant 0 : index
    %63 = vector.load %arg14[%c0_32, %c0_33] : memref<64x512xf32, #tpu.memory_space<vmem>>, vector<64x512xf32>
    tpu.vector_store %arg14[%c0_32, %c0_33], %62 {strides = array<i32>} : memref<64x512xf32, #tpu.memory_space<vmem>>, vector<64x512xf32>,
    %c0_i32 = arith.constant 0 : i32
    %64 = arith.cmpi eq, %arg0, %c0_i32 : i32
    %65 = arith.extui %64 : i1 to i32
    %c0_i32_34 = arith.constant 0 : i32
    %66 = arith.cmpi ne, %65, %c0_i32_34 : i32
    scf.if %66 {
      %cst_39 = arith.constant 0.000000e+00 : f32
      %69 = vector.broadcast %cst_39 : f32 to vector<8x256xf32>
      %c0_40 = arith.constant 0 : index
      %c0_41 = arith.constant 0 : index
      %70 = vector.load %arg15[%c0_40, %c0_41] : memref<8x256xf32, #tpu.memory_space<vmem>>, vector<8x256xf32>
      tpu.vector_store %arg15[%c0_40, %c0_41], %69 {strides = array<i32>} : memref<8x256xf32, #tpu.memory_space<vmem>>, vector<8x256xf32>,
      %cst_42 = arith.constant 0.000000e+00 : f32
      %71 = vector.broadcast %cst_42 : f32 to vector<8x256xf32>
      %c0_43 = arith.constant 0 : index
      %c0_44 = arith.constant 0 : index
      %72 = vector.load %arg16[%c0_43, %c0_44] : memref<8x256xf32, #tpu.memory_space<vmem>>, vector<8x256xf32>
      tpu.vector_store %arg16[%c0_43, %c0_44], %71 {strides = array<i32>} : memref<8x256xf32, #tpu.memory_space<vmem>>, vector<8x256xf32>,
    } else {
    }
    %c0_35 = arith.constant 0 : index
    %c0_36 = arith.constant 0 : index
    %67 = vector.load %arg1[%c0_35, %c0_36] : memref<8x1xi32, #tpu.memory_space<vmem>>, vector<8x1xi32>
    %c0_i32_37 = arith.constant 0 : i32
    %c8_i32 = arith.constant 8 : i32
    %68 = arith.addi %c0_i32_37, %c8_i32 : i32
    %c1_i32 = arith.constant 1 : i32
    scf.for %arg17 = %c0_i32_37 to %68 step %c1_i32  : i32 {
      %c1_i32_39 = arith.constant 1 : i32
      %69 = arith.muli %arg17, %c1_i32_39 : i32
      %c0_i32_40 = arith.constant 0 : i32
      %70 = arith.addi %c0_i32_40, %69 : i32
      %c8_i32_41 = arith.constant 8 : i32
      %71 = arith.muli %arg0, %c8_i32_41 : i32
      %72 = arith.addi %71, %70 : i32
      %c7_i32 = arith.constant 7 : i32
      %73 = arith.subi %c7_i32, %72 : i32
      %c8_i32_42 = arith.constant 8 : i32
      %74 = arith.muli %70, %c8_i32_42 : i32
      %75 = tpu.assume_multiple %74, 8 : i32
      %c7_i32_43 = arith.constant 7 : i32
      %76 = arith.subi %c7_i32_43, %70 : i32
      %c8_i32_44 = arith.constant 8 : i32
      %77 = arith.muli %76, %c8_i32_44 : i32
      %78 = tpu.assume_multiple %77, 8 : i32
      %c0_45 = arith.constant 0 : index
      %c0_46 = arith.constant 0 : index
      %79 = vector.load %arg15[%c0_45, %c0_46] : memref<8x256xf32, #tpu.memory_space<vmem>>, vector<8x256xf32>
      %c0_47 = arith.constant 0 : index
      %c0_48 = arith.constant 0 : index
      %80 = vector.load %arg16[%c0_47, %c0_48] : memref<8x256xf32, #tpu.memory_space<vmem>>, vector<8x256xf32>
      %81 = arith.truncf %79 : vector<8x256xf32> to vector<8x256xbf16>
      %c0_49 = arith.constant 0 : index
      %c0_50 = arith.constant 0 : index
      %82 = vector.load %arg10[%c0_49, %c0_50] : memref<256x1024xbf16, #tpu.memory_space<vmem>>, vector<256x1024xbf16>
      %cst_51 = arith.constant dense<0.000000e+00> : vector<8x1024xf32>
      %83 = tpu.matmul %81, %82, %cst_51 {dimension_numbers = #tpu.dot_dimension_numbers<[1], [0], [0], [1], [0, 0, 1, 1], [], []>} : vector<8x256xbf16>, vector<256x1024xbf16>, vector<8x1024xf32> -> vector<8x1024xf32>
      %84 = arith.index_cast %75 : i32 to index
      %c0_52 = arith.constant 0 : index
      %85 = vector.load %arg13[%84, %c0_52] : memref<64x512xf32, #tpu.memory_space<vmem>>, vector<8x512xf32>
      %86 = vector.extract_strided_slice %83 {offsets = [0, 0], sizes = [8, 512], strides = [1, 1]} : vector<8x1024xf32> to vector<8x512xf32>
      %87 = arith.addf %85, %86 : vector<8x512xf32>
      %88 = arith.index_cast %78 : i32 to index
      %c0_53 = arith.constant 0 : index
      %89 = vector.load %arg14[%88, %c0_53] : memref<64x512xf32, #tpu.memory_space<vmem>>, vector<8x512xf32>
      %90 = vector.extract_strided_slice %83 {offsets = [0, 512], sizes = [8, 512], strides = [1, 1]} : vector<8x1024xf32> to vector<8x512xf32>
      %91 = arith.addf %89, %90 : vector<8x512xf32>
      %92 = vector.extract_strided_slice %80 {offsets = [0, 0], sizes = [8, 128], strides = [1, 1]} : vector<8x256xf32> to vector<8x128xf32>
      %93 = vector.extract_strided_slice %87 {offsets = [0, 0], sizes = [8, 128], strides = [1, 1]} : vector<8x512xf32> to vector<8x128xf32>
      %94 = arith.negf %93 : vector<8x128xf32>
      %95 = math.exp %94 : vector<8x128xf32>
      %cst_54 = arith.constant 1.000000e+00 : f32
      %96 = vector.broadcast %cst_54 : f32 to vector<8x128xf32>
      %97 = arith.addf %96, %95 : vector<8x128xf32>
      %98 = arith.divf %96, %97 : vector<8x128xf32>
      %99 = vector.extract_strided_slice %87 {offsets = [0, 128], sizes = [8, 128], strides = [1, 1]} : vector<8x512xf32> to vector<8x128xf32>
      %100 = arith.negf %99 : vector<8x128xf32>
      %101 = math.exp %100 : vector<8x128xf32>
      %cst_55 = arith.constant 1.000000e+00 : f32
      %102 = vector.broadcast %cst_55 : f32 to vector<8x128xf32>
      %103 = arith.addf %102, %101 : vector<8x128xf32>
      %104 = arith.divf %102, %103 : vector<8x128xf32>
      %105 = vector.extract_strided_slice %87 {offsets = [0, 256], sizes = [8, 128], strides = [1, 1]} : vector<8x512xf32> to vector<8x128xf32>
      %106 = math.tanh %105 : vector<8x128xf32>
      %107 = vector.extract_strided_slice %87 {offsets = [0, 384], sizes = [8, 128], strides = [1, 1]} : vector<8x512xf32> to vector<8x128xf32>
      %108 = arith.negf %107 : vector<8x128xf32>
      %109 = math.exp %108 : vector<8x128xf32>
      %cst_56 = arith.constant 1.000000e+00 : f32
      %110 = vector.broadcast %cst_56 : f32 to vector<8x128xf32>
      %111 = arith.addf %110, %109 : vector<8x128xf32>
      %112 = arith.divf %110, %111 : vector<8x128xf32>
      %113 = arith.mulf %104, %92 : vector<8x128xf32>
      %114 = arith.mulf %98, %106 : vector<8x128xf32>
      %115 = arith.addf %113, %114 : vector<8x128xf32>
      %116 = math.tanh %115 : vector<8x128xf32>
      %117 = arith.mulf %112, %116 : vector<8x128xf32>
      %118 = vector.extract_strided_slice %80 {offsets = [0, 128], sizes = [8, 128], strides = [1, 1]} : vector<8x256xf32> to vector<8x128xf32>
      %119 = vector.extract_strided_slice %91 {offsets = [0, 0], sizes = [8, 128], strides = [1, 1]} : vector<8x512xf32> to vector<8x128xf32>
      %120 = arith.negf %119 : vector<8x128xf32>
      %121 = math.exp %120 : vector<8x128xf32>
      %cst_57 = arith.constant 1.000000e+00 : f32
      %122 = vector.broadcast %cst_57 : f32 to vector<8x128xf32>
      %123 = arith.addf %122, %121 : vector<8x128xf32>
      %124 = arith.divf %122, %123 : vector<8x128xf32>
      %125 = vector.extract_strided_slice %91 {offsets = [0, 128], sizes = [8, 128], strides = [1, 1]} : vector<8x512xf32> to vector<8x128xf32>
      %126 = arith.negf %125 : vector<8x128xf32>
      %127 = math.exp %126 : vector<8x128xf32>
      %cst_58 = arith.constant 1.000000e+00 : f32
      %128 = vector.broadcast %cst_58 : f32 to vector<8x128xf32>
      %129 = arith.addf %128, %127 : vector<8x128xf32>
      %130 = arith.divf %128, %129 : vector<8x128xf32>
      %131 = vector.extract_strided_slice %91 {offsets = [0, 256], sizes = [8, 128], strides = [1, 1]} : vector<8x512xf32> to vector<8x128xf32>
      %132 = math.tanh %131 : vector<8x128xf32>
      %133 = vector.extract_strided_slice %91 {offsets = [0, 384], sizes = [8, 128], strides = [1, 1]} : vector<8x512xf32> to vector<8x128xf32>
      %134 = arith.negf %133 : vector<8x128xf32>
      %135 = math.exp %134 : vector<8x128xf32>
      %cst_59 = arith.constant 1.000000e+00 : f32
      %136 = vector.broadcast %cst_59 : f32 to vector<8x128xf32>
      %137 = arith.addf %136, %135 : vector<8x128xf32>
      %138 = arith.divf %136, %137 : vector<8x128xf32>
      %139 = arith.mulf %130, %118 : vector<8x128xf32>
      %140 = arith.mulf %124, %132 : vector<8x128xf32>
      %141 = arith.addf %139, %140 : vector<8x128xf32>
      %142 = math.tanh %141 : vector<8x128xf32>
      %143 = arith.mulf %138, %142 : vector<8x128xf32>
      %144 = vector.broadcast %72 : i32 to vector<8x1xi32>
      %145 = arith.cmpi sgt, %67, %144 : vector<8x1xi32>
      %146 = vector.broadcast %73 : i32 to vector<8x1xi32>
      %147 = arith.cmpi sgt, %67, %146 : vector<8x1xi32>
      %cst_60 = arith.constant 0.000000e+00 : f32
      %148 = vector.broadcast %cst_60 : f32 to vector<8x128xf32>
      %149 = vector.shape_cast %145 : vector<8x1xi1> to vector<8x1xi1>
      %150 = vector.broadcast %149 : vector<8x1xi1> to vector<8x128xi1>
      %151 = arith.select %150, %117, %148 : vector<8x128xi1>, vector<8x128xf32>
      %152 = arith.truncf %151 : vector<8x128xf32> to vector<8x128xbf16>
      %153 = arith.index_cast %75 : i32 to index
      %c0_61 = arith.constant 0 : index
      %154 = vector.load %arg11[%153, %c0_61] : memref<64x128xbf16, #tpu.memory_space<vmem>>, vector<8x128xbf16>
      tpu.vector_store %arg11[%153, %c0_61], %152 {strides = array<i32>} : memref<64x128xbf16, #tpu.memory_space<vmem>>, vector<8x128xbf16>,
      %155 = vector.shape_cast %147 : vector<8x1xi1> to vector<8x1xi1>
      %156 = vector.broadcast %155 : vector<8x1xi1> to vector<8x128xi1>
      %157 = arith.select %156, %143, %148 : vector<8x128xi1>, vector<8x128xf32>
      %158 = arith.truncf %157 : vector<8x128xf32> to vector<8x128xbf16>
      %159 = arith.index_cast %78 : i32 to index
      %c0_62 = arith.constant 0 : index
      %160 = vector.load %arg12[%159, %c0_62] : memref<64x128xbf16, #tpu.memory_space<vmem>>, vector<8x128xbf16>
      tpu.vector_store %arg12[%159, %c0_62], %158 {strides = array<i32>} : memref<64x128xbf16, #tpu.memory_space<vmem>>, vector<8x128xbf16>,
      %161 = vector.extract_strided_slice %79 {offsets = [0, 0], sizes = [8, 128], strides = [1, 1]} : vector<8x256xf32> to vector<8x128xf32>
      %162 = vector.shape_cast %145 : vector<8x1xi1> to vector<8x1xi1>
      %163 = vector.broadcast %162 : vector<8x1xi1> to vector<8x128xi1>
      %164 = arith.select %163, %117, %161 : vector<8x128xi1>, vector<8x128xf32>
      %c0_63 = arith.constant 0 : index
      %c0_64 = arith.constant 0 : index
      %165 = vector.load %arg15[%c0_63, %c0_64] : memref<8x256xf32, #tpu.memory_space<vmem>>, vector<8x128xf32>
      tpu.vector_store %arg15[%c0_63, %c0_64], %164 {strides = array<i32>} : memref<8x256xf32, #tpu.memory_space<vmem>>, vector<8x128xf32>,
      %166 = vector.extract_strided_slice %80 {offsets = [0, 0], sizes = [8, 128], strides = [1, 1]} : vector<8x256xf32> to vector<8x128xf32>
      %167 = vector.shape_cast %145 : vector<8x1xi1> to vector<8x1xi1>
      %168 = vector.broadcast %167 : vector<8x1xi1> to vector<8x128xi1>
      %169 = arith.select %168, %115, %166 : vector<8x128xi1>, vector<8x128xf32>
      %c0_65 = arith.constant 0 : index
      %c0_66 = arith.constant 0 : index
      %170 = vector.load %arg16[%c0_65, %c0_66] : memref<8x256xf32, #tpu.memory_space<vmem>>, vector<8x128xf32>
      tpu.vector_store %arg16[%c0_65, %c0_66], %169 {strides = array<i32>} : memref<8x256xf32, #tpu.memory_space<vmem>>, vector<8x128xf32>,
      %171 = vector.extract_strided_slice %79 {offsets = [0, 128], sizes = [8, 128], strides = [1, 1]} : vector<8x256xf32> to vector<8x128xf32>
      %172 = vector.shape_cast %147 : vector<8x1xi1> to vector<8x1xi1>
      %173 = vector.broadcast %172 : vector<8x1xi1> to vector<8x128xi1>
      %174 = arith.select %173, %143, %171 : vector<8x128xi1>, vector<8x128xf32>
      %c0_67 = arith.constant 0 : index
      %c128 = arith.constant 128 : index
      %175 = vector.load %arg15[%c0_67, %c128] : memref<8x256xf32, #tpu.memory_space<vmem>>, vector<8x128xf32>
      tpu.vector_store %arg15[%c0_67, %c128], %174 {strides = array<i32>} : memref<8x256xf32, #tpu.memory_space<vmem>>, vector<8x128xf32>,
      %176 = vector.extract_strided_slice %80 {offsets = [0, 128], sizes = [8, 128], strides = [1, 1]} : vector<8x256xf32> to vector<8x128xf32>
      %177 = vector.shape_cast %147 : vector<8x1xi1> to vector<8x1xi1>
      %178 = vector.broadcast %177 : vector<8x1xi1> to vector<8x128xi1>
      %179 = arith.select %178, %141, %176 : vector<8x128xi1>, vector<8x128xf32>
      %c0_68 = arith.constant 0 : index
      %c128_69 = arith.constant 128 : index
      %180 = vector.load %arg16[%c0_68, %c128_69] : memref<8x256xf32, #tpu.memory_space<vmem>>, vector<8x128xf32>
      tpu.vector_store %arg16[%c0_68, %c128_69], %179 {strides = array<i32>} : memref<8x256xf32, #tpu.memory_space<vmem>>, vector<8x128xf32>,
    }
    %c8_i32_38 = arith.constant 8 : i32
    return
  }
  func.func @transform_0(%arg0: i32) -> (i32, i32) {
    %c0_i32 = arith.constant 0 : i32
    %c0_i32_0 = arith.constant 0 : i32
    %c0_i32_1 = arith.constant 0 : i32
    return %c0_i32, %c0_i32_0 : i32, i32
  }
  func.func @transform_1(%arg0: i32) -> (i32, i32) {
    %c0_i32 = arith.constant 0 : i32
    %c0_i32_0 = arith.constant 0 : i32
    return %arg0, %c0_i32 : i32, i32
  }
  func.func @transform_2(%arg0: i32) -> (i32, i32) {
    %c0_i32 = arith.constant 0 : i32
    %0 = arith.subi %c0_i32, %arg0 : i32
    %c0_i32_0 = arith.constant 0 : i32
    %c0_i32_1 = arith.constant 0 : i32
    return %0, %c0_i32_0 : i32, i32
  }
  func.func @transform_3(%arg0: i32) -> (i32, i32) {
    %c0_i32 = arith.constant 0 : i32
    %c0_i32_0 = arith.constant 0 : i32
    %c0_i32_1 = arith.constant 0 : i32
    return %c0_i32, %c0_i32_0 : i32, i32
  }
  func.func @transform_4(%arg0: i32) -> (i32, i32) {
    %c0_i32 = arith.constant 0 : i32
    %c0_i32_0 = arith.constant 0 : i32
    %c0_i32_1 = arith.constant 0 : i32
    return %c0_i32, %c0_i32_0 : i32, i32
  }
  func.func @transform_5(%arg0: i32) -> (i32, i32) {
    %c0_i32 = arith.constant 0 : i32
    %c0_i32_0 = arith.constant 0 : i32
    %c0_i32_1 = arith.constant 0 : i32
    return %c0_i32, %c0_i32_0 : i32, i32
  }
  func.func @transform_6(%arg0: i32) -> (i32, i32) {
    %c0_i32 = arith.constant 0 : i32
    %c0_i32_0 = arith.constant 0 : i32
    %c0_i32_1 = arith.constant 0 : i32
    return %c0_i32, %c0_i32_0 : i32, i32
  }
  func.func @transform_7(%arg0: i32) -> (i32, i32) {
    %c0_i32 = arith.constant 0 : i32
    %c0_i32_0 = arith.constant 0 : i32
    %c0_i32_1 = arith.constant 0 : i32
    return %c0_i32, %c0_i32_0 : i32, i32
  }
  func.func @transform_8(%arg0: i32) -> (i32, i32) {
    %c0_i32 = arith.constant 0 : i32
    %c0_i32_0 = arith.constant 0 : i32
    %c0_i32_1 = arith.constant 0 : i32
    return %c0_i32, %c0_i32_0 : i32, i32
  }
  func.func @transform_9(%arg0: i32) -> (i32, i32) {
    %c0_i32 = arith.constant 0 : i32
    %c0_i32_0 = arith.constant 0 : i32
    %c0_i32_1 = arith.constant 0 : i32
    return %c0_i32, %c0_i32_0 : i32, i32
  }
  func.func @transform_10(%arg0: i32) -> (i32, i32) {
    %c0_i32 = arith.constant 0 : i32
    %c0_i32_0 = arith.constant 0 : i32
    return %arg0, %c0_i32 : i32, i32
  }
  func.func @transform_11(%arg0: i32) -> (i32, i32) {
    %c0_i32 = arith.constant 0 : i32
    %0 = arith.subi %c0_i32, %arg0 : i32
    %c0_i32_0 = arith.constant 0 : i32
    %c0_i32_1 = arith.constant 0 : i32
    return %0, %c0_i32_0 : i32, i32
  }
}

</mosaic_0001>

<llo_original>
// kernel: tpu_custom_call.1
$region0: #{tpu_custom_call.1}
  #allocation0 [shape = 'u32[]', space=smem, size = 0x4, offset = 0x4, fixed_abs, tag = 'smem constant byte address 0x4 - core index']
  #allocation1 [shape = 'u32[144,128]{1,0:T(1,128)}', space=vmem, size = 0x12000, scoped, tag = 'internal scratch']
  #allocation2 [shape = 'f32[64,512]{1,0:T(8,128)}', space=vmem, size = 0x20000, scoped, tag = 'scratch operand']
  #allocation3 [shape = 'f32[64,512]{1,0:T(8,128)}', space=vmem, size = 0x20000, scoped, tag = 'scratch operand']
  #allocation4 [shape = 'f32[8,256]{1,0:T(8,128)}', space=vmem, size = 0x2000, scoped, tag = 'scratch operand']
  #allocation5 [shape = 'f32[8,256]{1,0:T(8,128)}', space=vmem, size = 0x2000, scoped, tag = 'scratch operand']
  %s0 = inlined_call_operand.vmem [shape: s32[8,1], index: 0, kind: input, shape index: {}]
  %s1 = inlined_call_operand.vmem [shape: f32[64,32], index: 1, kind: input, shape index: {}]
  %s2 = inlined_call_operand.vmem [shape: f32[64,32], index: 2, kind: input, shape index: {}]
  %s3 = inlined_call_operand.vmem [shape: f32[1,32], index: 3, kind: input, shape index: {}]
  %s4 = inlined_call_operand.vmem [shape: f32[1,32], index: 4, kind: input, shape index: {}]
  %s5 = inlined_call_operand.vmem [shape: bf16[32,512], index: 5, kind: input, shape index: {}]
  %s6 = inlined_call_operand.vmem [shape: f32[1,512], index: 6, kind: input, shape index: {}]
  %s7 = inlined_call_operand.vmem [shape: bf16[32,512], index: 7, kind: input, shape index: {}]
  %s8 = inlined_call_operand.vmem [shape: f32[1,512], index: 8, kind: input, shape index: {}]
  %s9 = inlined_call_operand.hbm [shape: bf16[256,1024], index: 9, kind: input, shape index: {}]
  %s10 = inlined_call_operand.hbm [shape: bf16[64,128], index: 10, kind: output, shape index: {0}]
  %s11 = inlined_call_operand.hbm [shape: bf16[64,128], index: 11, kind: output, shape index: {1}]
  %12 = xla_tuple %s10, %s11
  %s13 = sld [smem:[#allocation0]]
  $region73: #{tpu_custom_call.1} parent=0
    _
  %s15 = ssub.s32 1, %s13
  %s16 = scalar_select 0, %s15, %s13
  $region1: #{tpu_custom_call.1} parent=0
    #allocation6 [shape = 'u8[524288]{0}', space=vmem, size = 0x80000, scoped, tag = 'input window, operand 9, single buffered']
    #allocation7 [shape = 's32[1]{0}', space=sflag, size = 0x4, scoped, tag = 'scoped memory for tpu_custom_call.1']
    #allocation8 [shape = 's32[1]{0}', space=sflag, size = 0x4, scoped, tag = 'scoped memory for tpu_custom_call.1']
    #allocation9 [shape = 'u8[16384]{0}', space=vmem, size = 0x4000, scoped, tag = 'output window, operand 0, single buffered']
    #allocation10 [shape = 'u8[16384]{0}', space=vmem, size = 0x4000, scoped, tag = 'output window, operand 1, single buffered']
    #allocation11 [shape = 's32[1]{0}', space=sflag, size = 0x4, scoped, tag = 'scoped memory for tpu_custom_call.1']
    %17 = vsyncpa [#allocation7], 0
    %18 = vsyncpa [#allocation8], 0
    %19 = vsyncpa [#allocation11], 0
    // Predicated region
    $region2: #{tpu_custom_call.1} parent=1 // pred_check
      _
    $region3: #{tpu_custom_call.1} parent=1 // pred_check_branch
      %21 = sbr.rel (0) target = $region5
    $region4: #{tpu_custom_call.1} parent=1 // pred_region
      _
    $region5: #{tpu_custom_call.1} parent=1 // pred_fallthru
      _
    // Predicated region
    $region6: #{tpu_custom_call.1} parent=1 // pred_check
      _
    $region7: #{tpu_custom_call.1} parent=1 // pred_check_branch
      %23 = sbr.rel (0) target = $region9
    $region8: #{tpu_custom_call.1} parent=1 // pred_region
      _
    $region9: #{tpu_custom_call.1} parent=1 // pred_fallthru
      _
    // Predicated region
    $region10: #{tpu_custom_call.1} parent=1 // pred_check
      _
    $region11: #{tpu_custom_call.1} parent=1 // pred_check_branch
      %25 = sbr.rel (0) target = $region13
    $region12: #{tpu_custom_call.1} parent=1 // pred_region
      %s26 = ssub.s32 0, 0
      %s27 = smul.u32 8, %s26
      %p28 = scmp.lt.s32.totalorder %s27, 7
      %s29 = scalar_select %p28, %s27, 7
      %s30 = smul.addr %s29, 8
      %s31 = scalar_lea.vmem %s2, %s30
      %s32 = ssub.s32 0, 0
      %s33 = smul.u32 8, %s32
    $region13: #{tpu_custom_call.1} parent=1 // pred_fallthru
      _
    // Predicated region
    $region14: #{tpu_custom_call.1} parent=1 // pred_check
      _
    $region15: #{tpu_custom_call.1} parent=1 // pred_check_branch
      %35 = sbr.rel (0) target = $region17
    $region16: #{tpu_custom_call.1} parent=1 // pred_region
      _
    $region17: #{tpu_custom_call.1} parent=1 // pred_fallthru
      _
    // Predicated region
    $region18: #{tpu_custom_call.1} parent=1 // pred_check
      _
    $region19: #{tpu_custom_call.1} parent=1 // pred_check_branch
      %37 = sbr.rel (0) target = $region21
    $region20: #{tpu_custom_call.1} parent=1 // pred_region
      _
    $region21: #{tpu_custom_call.1} parent=1 // pred_fallthru
      _
    // Predicated region
    $region22: #{tpu_custom_call.1} parent=1 // pred_check
      _
    $region23: #{tpu_custom_call.1} parent=1 // pred_check_branch
      %39 = sbr.rel (0) target = $region25
    $region24: #{tpu_custom_call.1} parent=1 // pred_region
      _
    $region25: #{tpu_custom_call.1} parent=1 // pred_fallthru
      _
    // Predicated region
    $region26: #{tpu_custom_call.1} parent=1 // pred_check
      _
    $region27: #{tpu_custom_call.1} parent=1 // pred_check_branch
      %41 = sbr.rel (0) target = $region29
    $region28: #{tpu_custom_call.1} parent=1 // pred_region
      _
    $region29: #{tpu_custom_call.1} parent=1 // pred_fallthru
      _
    // Predicated region
    $region30: #{tpu_custom_call.1} parent=1 // pred_check
      _
    $region31: #{tpu_custom_call.1} parent=1 // pred_check_branch
      %43 = sbr.rel (0) target = $region33
    $region32: #{tpu_custom_call.1} parent=1 // pred_region
      _
    $region33: #{tpu_custom_call.1} parent=1 // pred_fallthru
      _
    // Predicated region
    $region34: #{tpu_custom_call.1} parent=1 // pred_check
      _
    $region35: #{tpu_custom_call.1} parent=1 // pred_check_branch
      %45 = sbr.rel (0) target = $region37
    $region36: #{tpu_custom_call.1} parent=1 // pred_region
      _
    $region37: #{tpu_custom_call.1} parent=1 // pred_fallthru
      _
    // Predicated region
    $region38: #{tpu_custom_call.1} parent=1 // pred_check
      _
    $region39: #{tpu_custom_call.1} parent=1 // pred_check_branch
      %47 = sbr.rel (0) target = $region41
    $region40: #{tpu_custom_call.1} parent=1 // pred_region
      %s49 = ssub.s32 16384, 16384
      %50 = vsyncadd [#allocation7], %s49
      %s51 = sshll.u32 [#allocation6], 4
      %s52 = int_to_ptr.vmem [resolvable:$true] %s51
      %57 = dma.hbm_to_vmem [thread:$0]  %s9, 16384, %s52, [#allocation7], 512, 512, 32
    $region41: #{tpu_custom_call.1} parent=1 // pred_fallthru
      _
    // Predicated region
    $region42: #{tpu_custom_call.1} parent=1 // pred_check
      _
    $region43: #{tpu_custom_call.1} parent=1 // pred_check_branch
      %59 = sbr.rel (0) target = $region45
    $region44: #{tpu_custom_call.1} parent=1 // pred_region
      %60 = dma.done [#allocation7], 16384
    $region45: #{tpu_custom_call.1} parent=1 // pred_fallthru
      _
    %s61 = ssub.s32 0, 0
    %s62 = smul.u32 8, %s61
    %p63 = scmp.lt.s32.totalorder %s62, 7
    %s64 = scalar_select %p63, %s62, 7
    %s65 = smul.addr %s64, 8
    %s66 = scalar_lea.vmem %s2, %s65
    %s67 = ssub.s32 0, 0
    %s68 = smul.u32 8, %s67
    %p69 = scmp.lt.s32.totalorder %s68, 7
    %s70 = scalar_select %p69, %s68, 7
    %s71 = smul.addr %s70, 8
    %s72 = scalar_lea.vmem %s2, %s71
    %s73 = ssub.s32 0, 0
    %s74 = smul.u32 8, %s73
    %s75 = ssub.s32 0, 0
    %s76 = smul.u32 8, %s75
    %v78 = vld [vmem:[%s1] sm:$0xff]
    %v79 = vld [vmem:[%s1 + $0x8] sm:$0xff]
    %v80 = vld [vmem:[%s1 + $0x10] sm:$0xff]
    %v81 = vld [vmem:[%s1 + $0x18] sm:$0xff]
    %v82 = vld [vmem:[%s1 + $0x20] sm:$0xff]
    %v83 = vld [vmem:[%s1 + $0x28] sm:$0xff]
    %v84 = vld [vmem:[%s1 + $0x30] sm:$0xff]
    %v85 = vld [vmem:[%s1 + $0x38] sm:$0xff]
    %vm86 = vcmask 261120
    %v87 = vsel %vm86, %v78, 0.0
    %88 = vadd.xlane.f32.xlu0 %v87
    %v89 = vpop.xlane.xlu0 %88
    %v90 = vsel %vm86, %v79, 0.0
    %91 = vadd.xlane.f32.xlu0 %v90
    %v92 = vpop.xlane.xlu0 %91
    %v93 = vsel %vm86, %v80, 0.0
    %94 = vadd.xlane.f32.xlu0 %v93
    %v95 = vpop.xlane.xlu0 %94
    %v96 = vsel %vm86, %v81, 0.0
    %97 = vadd.xlane.f32.xlu0 %v96
    %v98 = vpop.xlane.xlu0 %97
    %v99 = vsel %vm86, %v82, 0.0
    %100 = vadd.xlane.f32.xlu0 %v99
    %v101 = vpop.xlane.xlu0 %100
    %v102 = vsel %vm86, %v83, 0.0
    %103 = vadd.xlane.f32.xlu0 %v102
    %v104 = vpop.xlane.xlu0 %103
    %v105 = vsel %vm86, %v84, 0.0
    %106 = vadd.xlane.f32.xlu0 %v105
    %v107 = vpop.xlane.xlu0 %106
    %v108 = vsel %vm86, %v85, 0.0
    %109 = vadd.xlane.f32.xlu0 %v108
    %v110 = vpop.xlane.xlu0 %109
    %v111 = vrcp.pop 32.0
    %v112 = vmul.f32 %v89, %v111
    %v113 = vmul.f32 %v92, %v111
    %v114 = vmul.f32 %v95, %v111
    %v115 = vmul.f32 %v98, %v111
    %v116 = vmul.f32 %v101, %v111
    %v117 = vmul.f32 %v104, %v111
    %v118 = vmul.f32 %v107, %v111
    %v119 = vmul.f32 %v110, %v111
    %v120 = vsub.f32 %v78, %v112
    %v121 = vsub.f32 %v79, %v113
    %v122 = vsub.f32 %v80, %v114
    %v123 = vsub.f32 %v81, %v115
    %v124 = vsub.f32 %v82, %v116
    %v125 = vsub.f32 %v83, %v117
    %v126 = vsub.f32 %v84, %v118
    %v127 = vsub.f32 %v85, %v119
    %v128 = vmul.f32 %v120, %v120
    %v129 = vmul.f32 %v121, %v121
    %v130 = vmul.f32 %v122, %v122
    %v131 = vmul.f32 %v123, %v123
    %v132 = vmul.f32 %v124, %v124
    %v133 = vmul.f32 %v125, %v125
    %v134 = vmul.f32 %v126, %v126
    %v135 = vmul.f32 %v127, %v127
    %v136 = vsel %vm86, %v128, 0.0
    %137 = vadd.xlane.f32.xlu0 %v136
    %v138 = vpop.xlane.xlu0 %137
    %v139 = vsel %vm86, %v129, 0.0
    %140 = vadd.xlane.f32.xlu0 %v139
    %v141 = vpop.xlane.xlu0 %140
    %v142 = vsel %vm86, %v130, 0.0
    %143 = vadd.xlane.f32.xlu0 %v142
    %v144 = vpop.xlane.xlu0 %143
    %v145 = vsel %vm86, %v131, 0.0
    %146 = vadd.xlane.f32.xlu0 %v145
    %v147 = vpop.xlane.xlu0 %146
    %v148 = vsel %vm86, %v132, 0.0
    %149 = vadd.xlane.f32.xlu0 %v148
    %v150 = vpop.xlane.xlu0 %149
    %v151 = vsel %vm86, %v133, 0.0
    %152 = vadd.xlane.f32.xlu0 %v151
    %v153 = vpop.xlane.xlu0 %152
    %v154 = vsel %vm86, %v134, 0.0
    %155 = vadd.xlane.f32.xlu0 %v154
    %v156 = vpop.xlane.xlu0 %155
    %v157 = vsel %vm86, %v135, 0.0
    %158 = vadd.xlane.f32.xlu0 %v157
    %v159 = vpop.xlane.xlu0 %158
    %v160 = vmul.f32 %v138, %v111
    %v161 = vmul.f32 %v141, %v111
    %v162 = vmul.f32 %v144, %v111
    %v163 = vmul.f32 %v147, %v111
    %v164 = vmul.f32 %v150, %v111
    %v165 = vmul.f32 %v153, %v111
    %v166 = vmul.f32 %v156, %v111
    %v167 = vmul.f32 %v159, %v111
    %v168 = vadd.f32 %v160, 1e-05
    %v169 = vadd.f32 %v161, 1e-05
    %v170 = vadd.f32 %v162, 1e-05
    %v171 = vadd.f32 %v163, 1e-05
    %v172 = vadd.f32 %v164, 1e-05
    %v173 = vadd.f32 %v165, 1e-05
    %v174 = vadd.f32 %v166, 1e-05
    %v175 = vadd.f32 %v167, 1e-05
    %v176 = vrsqrt.pop %v168
    %v177 = vrsqrt.pop %v169
    %v178 = vrsqrt.pop %v170
    %v179 = vrsqrt.pop %v171
    %v180 = vrsqrt.pop %v172
    %v181 = vrsqrt.pop %v173
    %v182 = vrsqrt.pop %v174
    %v183 = vrsqrt.pop %v175
    %v184 = vmul.f32 %v120, %v176
    %v185 = vmul.f32 %v121, %v177
    %v186 = vmul.f32 %v122, %v178
    %v187 = vmul.f32 %v123, %v179
    %v188 = vmul.f32 %v124, %v180
    %v189 = vmul.f32 %v125, %v181
    %v190 = vmul.f32 %v126, %v182
    %v191 = vmul.f32 %v127, %v183
    %v192 = vld [vmem:[%s3] sm:$0x1]
    %v194 = vlaneseq
    %v195 = vshrl.u32 %v194, 7
    %v196 = vsub.s32 0, %v195
    %v197 = vrot.slane %v192, %v196
    %v199 = vmul.f32 %v184, %v197
    %v200 = vmul.f32 %v185, %v197
    %v201 = vmul.f32 %v186, %v197
    %v202 = vmul.f32 %v187, %v197
    %v203 = vmul.f32 %v188, %v197
    %v204 = vmul.f32 %v189, %v197
    %v205 = vmul.f32 %v190, %v197
    %v206 = vmul.f32 %v191, %v197
    %v207 = vld [vmem:[%s4] sm:$0x1]
    %v209 = vlaneseq
    %v210 = vshrl.u32 %v209, 7
    %v211 = vsub.s32 0, %v210
    %v212 = vrot.slane %v207, %v211
    %v214 = vadd.f32 %v199, %v212
    %v215 = vadd.f32 %v200, %v212
    %v216 = vadd.f32 %v201, %v212
    %v217 = vadd.f32 %v202, %v212
    %v218 = vadd.f32 %v203, %v212
    %v219 = vadd.f32 %v204, %v212
    %v220 = vadd.f32 %v205, %v212
    %v221 = vadd.f32 %v206, %v212
    %v222 = vpack.c.bf16 %v215, %v214
    %v223 = vpack.c.bf16 %v217, %v216
    %v224 = vpack.c.bf16 %v219, %v218
    %v225 = vpack.c.bf16 %v221, %v220
    %v226 = vld [vmem:[%s5] sm:$0xff]
    %v227 = vld [vmem:[%s5 + $0x8] sm:$0xff]
    %v228 = vld [vmem:[%s5 + $0x10] sm:$0xff]
    %v229 = vld [vmem:[%s5 + $0x18] sm:$0xff]
    %v230 = vld [vmem:[%s5 + $0x20] sm:$0xff]
    %v231 = vld [vmem:[%s5 + $0x28] sm:$0xff]
    %v232 = vld [vmem:[%s5 + $0x30] sm:$0xff]
    %v233 = vld [vmem:[%s5 + $0x38] sm:$0xff]
    %v234 = vld [vmem:[%s6] sm:$0xf]
    %v236 = vlaneseq
    %v237 = vshrl.u32 %v236, 7
    %v238 = vsub.s32 0, %v237
    %v239 = vrot.slane %v234, %v238
    %v240 = vlaneseq
    %v241 = vshrl.u32 %v240, 7
    %v242 = vsub.s32 1, %v241
    %v243 = vrot.slane %v234, %v242
    %v244 = vlaneseq
    %v245 = vshrl.u32 %v244, 7
    %v246 = vsub.s32 2, %v245
    %v247 = vrot.slane %v234, %v246
    %v248 = vlaneseq
    %v249 = vshrl.u32 %v248, 7
    %v250 = vsub.s32 3, %v249
    %v251 = vrot.slane %v234, %v250
    %v264 = vunpack.c.l.b16 %v226
    %v265 = vunpack.c.h.b16 %v226
    %v266 = vunpack.c.l.b16 %v227
    %v267 = vunpack.c.h.b16 %v227
    %v268 = vunpack.c.l.b16 %v228
    %v269 = vunpack.c.h.b16 %v228
    %v270 = vunpack.c.l.b16 %v229
    %v271 = vunpack.c.h.b16 %v229
    %v272 = vunpack.c.l.b16 %v230
    %v273 = vunpack.c.h.b16 %v230
    %v274 = vunpack.c.l.b16 %v231
    %v275 = vunpack.c.h.b16 %v231
    %v276 = vunpack.c.l.b16 %v232
    %v277 = vunpack.c.h.b16 %v232
    %v278 = vunpack.c.l.b16 %v233
    %v279 = vunpack.c.h.b16 %v233
    %v280 = vpack.c.b16 %v268, %v264
    %v281 = vpack.c.b16 %v269, %v265
    %v282 = vpack.c.b16 %v270, %v266
    %v283 = vpack.c.b16 %v271, %v267
    %v284 = vpack.c.b16 %v276, %v272
    %v285 = vpack.c.b16 %v277, %v273
    %v286 = vpack.c.b16 %v278, %v274
    %v287 = vpack.c.b16 %v279, %v275
    %v297 = vsel %vm86, %v222, 0
    %v300 = vsel %vm86, %v223, 0
    %v303 = vsel %vm86, %v224, 0
    %v306 = vsel %vm86, %v225, 0
    %308 = vmatprep.subr.bf16.mxu0 %v281
    %309 = vmatpush1.bf16.msra.mxu0 %v280
    %310 = vmatprep.subr.bf16.mxu0 %v285
    %311 = vmatpush1.bf16.msra.mxu0 %v284
    %312 = vmatprep.subr.bf16.mxu0 0
    %313 = vmatpush1.bf16.msra.mxu0 0
    %314 = vmatprep.subr.bf16.mxu0 0
    %315 = vmatpush1.bf16.msra.mxu0 0
    %316 = vmatprep.subr.bf16.mxu0 0
    %317 = vmatpush1.bf16.msra.mxu0 0
    %318 = vmatprep.subr.bf16.mxu0 0
    %319 = vmatpush1.bf16.msra.mxu0 0
    %320 = vmatprep.subr.bf16.mxu0 0
    %321 = vmatpush1.bf16.msra.mxu0 0
    %322 = vmatprep.subr.bf16.mxu0 0
    %323 = vmatpush1.bf16.msra.mxu0 0
    %324 = vmatprep.subr.bf16.mxu0 0
    %325 = vmatpush1.bf16.msra.mxu0 0
    %326 = vmatprep.subr.bf16.mxu0 0
    %327 = vmatpush1.bf16.msra.mxu0 0
    %328 = vmatprep.subr.bf16.mxu0 0
    %329 = vmatpush1.bf16.msra.mxu0 0
    %330 = vmatprep.subr.bf16.mxu0 0
    %331 = vmatpush1.bf16.msra.mxu0 0
    %332 = vmatprep.subr.bf16.mxu0 0
    %333 = vmatpush1.bf16.msra.mxu0 0
    %334 = vmatprep.subr.bf16.mxu0 0
    %335 = vmatpush1.bf16.msra.mxu0 0
    %336 = vmatprep.subr.bf16.mxu0 0
    %337 = vmatpush1.bf16.msra.mxu0 0
    %338 = vmatprep.subr.bf16.mxu0 0
    %339 = vmatpush1.bf16.msra.mxu0 0
    %340 = vmatprep.mubr.bf16.mxu0 0
    %341 = vmatmul.mubr.bf16.gmra.mrb[0].mxu0 %v297
    %v342 = vpop.f32.mrb[0].mxu0
    %v343 = vadd.f32 %v239, %v342
    %v344 = vpop.f32.mrb[0].mxu0
    %v345 = vadd.f32 %v243, %v344
    %v346 = vpop.f32.mrb[0].mxu0
    %v347 = vadd.f32 %v239, %v346
    %v348 = vpop.f32.mrb[0].mxu0
    %v349 = vadd.f32 %v243, %v348
    %350 = vmatprep.mubr.bf16.mxu0 0
    %351 = vmatmul.mubr.bf16.gmra.mrb[0].mxu0 %v300
    %v352 = vpop.f32.mrb[0].mxu0
    %v353 = vadd.f32 %v239, %v352
    %v354 = vpop.f32.mrb[0].mxu0
    %v355 = vadd.f32 %v243, %v354
    %v356 = vpop.f32.mrb[0].mxu0
    %v357 = vadd.f32 %v239, %v356
    %v358 = vpop.f32.mrb[0].mxu0
    %v359 = vadd.f32 %v243, %v358
    %360 = vmatprep.mubr.bf16.mxu0 0
    %361 = vmatmul.mubr.bf16.gmra.mrb[0].mxu0 %v303
    %v362 = vpop.f32.mrb[0].mxu0
    %v363 = vadd.f32 %v239, %v362
    %v364 = vpop.f32.mrb[0].mxu0
    %v365 = vadd.f32 %v243, %v364
    %v366 = vpop.f32.mrb[0].mxu0
    %v367 = vadd.f32 %v239, %v366
    %v368 = vpop.f32.mrb[0].mxu0
    %v369 = vadd.f32 %v243, %v368
    %370 = vmatprep.mubr.bf16.mxu0 0
    %371 = vmatmul.mubr.bf16.gmra.mrb[0].mxu0 %v306
    %v372 = vpop.f32.mrb[0].mxu0
    %v373 = vadd.f32 %v239, %v372
    %v374 = vpop.f32.mrb[0].mxu0
    %v375 = vadd.f32 %v243, %v374
    %v376 = vpop.f32.mrb[0].mxu0
    %v377 = vadd.f32 %v239, %v376
    %v378 = vpop.f32.mrb[0].mxu0
    %v379 = vadd.f32 %v243, %v378
    %380 = vdwg.mxu0
    %381 = vmatprep.subr.bf16.mxu0 %v283
    %382 = vmatpush1.bf16.msra.mxu0 %v282
    %383 = vmatprep.subr.bf16.mxu0 %v287
    %384 = vmatpush1.bf16.msra.mxu0 %v286
    %385 = vmatprep.subr.bf16.mxu0 0
    %386 = vmatpush1.bf16.msra.mxu0 0
    %387 = vmatprep.subr.bf16.mxu0 0
    %388 = vmatpush1.bf16.msra.mxu0 0
    %389 = vmatprep.subr.bf16.mxu0 0
    %390 = vmatpush1.bf16.msra.mxu0 0
    %391 = vmatprep.subr.bf16.mxu0 0
    %392 = vmatpush1.bf16.msra.mxu0 0
    %393 = vmatprep.subr.bf16.mxu0 0
    %394 = vmatpush1.bf16.msra.mxu0 0
    %395 = vmatprep.subr.bf16.mxu0 0
    %396 = vmatpush1.bf16.msra.mxu0 0
    %397 = vmatprep.subr.bf16.mxu0 0
    %398 = vmatpush1.bf16.msra.mxu0 0
    %399 = vmatprep.subr.bf16.mxu0 0
    %400 = vmatpush1.bf16.msra.mxu0 0
    %401 = vmatprep.subr.bf16.mxu0 0
    %402 = vmatpush1.bf16.msra.mxu0 0
    %403 = vmatprep.subr.bf16.mxu0 0
    %404 = vmatpush1.bf16.msra.mxu0 0
    %405 = vmatprep.subr.bf16.mxu0 0
    %406 = vmatpush1.bf16.msra.mxu0 0
    %407 = vmatprep.subr.bf16.mxu0 0
    %408 = vmatpush1.bf16.msra.mxu0 0
    %409 = vmatprep.subr.bf16.mxu0 0
    %410 = vmatpush1.bf16.msra.mxu0 0
    %411 = vmatprep.subr.bf16.mxu0 0
    %412 = vmatpush1.bf16.msra.mxu0 0
    %413 = vmatprep.mubr.bf16.mxu0 0
    %414 = vmatmul.mubr.bf16.gmra.mrb[0].mxu0 %v297
    %v415 = vpop.f32.mrb[0].mxu0
    %v416 = vadd.f32 %v247, %v415
    %v417 = vpop.f32.mrb[0].mxu0
    %v418 = vadd.f32 %v251, %v417
    %v419 = vpop.f32.mrb[0].mxu0
    %v420 = vadd.f32 %v247, %v419
    %v421 = vpop.f32.mrb[0].mxu0
    %v422 = vadd.f32 %v251, %v421
    %423 = vmatprep.mubr.bf16.mxu0 0
    %424 = vmatmul.mubr.bf16.gmra.mrb[0].mxu0 %v300
    %v425 = vpop.f32.mrb[0].mxu0
    %v426 = vadd.f32 %v247, %v425
    %v427 = vpop.f32.mrb[0].mxu0
    %v428 = vadd.f32 %v251, %v427
    %v429 = vpop.f32.mrb[0].mxu0
    %v430 = vadd.f32 %v247, %v429
    %v431 = vpop.f32.mrb[0].mxu0
    %v432 = vadd.f32 %v251, %v431
    %433 = vmatprep.mubr.bf16.mxu0 0
    %434 = vmatmul.mubr.bf16.gmra.mrb[0].mxu0 %v303
    %v435 = vpop.f32.mrb[0].mxu0
    %v436 = vadd.f32 %v247, %v435
    %v437 = vpop.f32.mrb[0].mxu0
    %v438 = vadd.f32 %v251, %v437
    %v439 = vpop.f32.mrb[0].mxu0
    %v440 = vadd.f32 %v247, %v439
    %v441 = vpop.f32.mrb[0].mxu0
    %v442 = vadd.f32 %v251, %v441
    %443 = vmatprep.mubr.bf16.mxu0 0
    %444 = vmatmul.mubr.bf16.gmra.mrb[0].mxu0 %v306
    %v445 = vpop.f32.mrb[0].mxu0
    %v446 = vadd.f32 %v247, %v445
    %v447 = vpop.f32.mrb[0].mxu0
    %v448 = vadd.f32 %v251, %v447
    %v449 = vpop.f32.mrb[0].mxu0
    %v450 = vadd.f32 %v247, %v449
    %v451 = vpop.f32.mrb[0].mxu0
    %v452 = vadd.f32 %v251, %v451
    %453 = vdwg.mxu0
    %454 = vst [vmem:[#allocation2] sm:$0xff] %v343
    %455 = vst [vmem:[#allocation2 + $0x8] sm:$0xff] %v345
    %456 = vst [vmem:[#allocation2 + $0x10] sm:$0xff] %v416
    %457 = vst [vmem:[#allocation2 + $0x18] sm:$0xff] %v418
    %458 = vst [vmem:[#allocation2 + $0x20] sm:$0xff] %v347
    %459 = vst [vmem:[#allocation2 + $0x28] sm:$0xff] %v349
    %460 = vst [vmem:[#allocation2 + $0x30] sm:$0xff] %v420
    %461 = vst [vmem:[#allocation2 + $0x38] sm:$0xff] %v422
    %462 = vst [vmem:[#allocation2 + $0x40] sm:$0xff] %v353
    %463 = vst [vmem:[#allocation2 + $0x48] sm:$0xff] %v355
    %464 = vst [vmem:[#allocation2 + $0x50] sm:$0xff] %v426
    %465 = vst [vmem:[#allocation2 + $0x58] sm:$0xff] %v428
    %466 = vst [vmem:[#allocation2 + $0x60] sm:$0xff] %v357
    %467 = vst [vmem:[#allocation2 + $0x68] sm:$0xff] %v359
    %468 = vst [vmem:[#allocation2 + $0x70] sm:$0xff] %v430
    %469 = vst [vmem:[#allocation2 + $0x78] sm:$0xff] %v432
    %470 = vst [vmem:[#allocation2 + $0x80] sm:$0xff] %v363
    %471 = vst [vmem:[#allocation2 + $0x88] sm:$0xff] %v365
    %472 = vst [vmem:[#allocation2 + $0x90] sm:$0xff] %v436
    %473 = vst [vmem:[#allocation2 + $0x98] sm:$0xff] %v438
    %474 = vst [vmem:[#allocation2 + $0xa0] sm:$0xff] %v367
    %475 = vst [vmem:[#allocation2 + $0xa8] sm:$0xff] %v369
    %476 = vst [vmem:[#allocation2 + $0xb0] sm:$0xff] %v440
    %477 = vst [vmem:[#allocation2 + $0xb8] sm:$0xff] %v442
    %478 = vst [vmem:[#allocation2 + $0xc0] sm:$0xff] %v373
    %479 = vst [vmem:[#allocation2 + $0xc8] sm:$0xff] %v375
    %480 = vst [vmem:[#allocation2 + $0xd0] sm:$0xff] %v446
    %481 = vst [vmem:[#allocation2 + $0xd8] sm:$0xff] %v448
    %482 = vst [vmem:[#allocation2 + $0xe0] sm:$0xff] %v377
    %483 = vst [vmem:[#allocation2 + $0xe8] sm:$0xff] %v379
    %484 = vst [vmem:[#allocation2 + $0xf0] sm:$0xff] %v450
    %485 = vst [vmem:[#allocation2 + $0xf8] sm:$0xff] %v452
    %v486 = vld [vmem:[%s72] sm:$0xff]
    %v487 = vld [vmem:[%s72 + $0x8] sm:$0xff]
    %v488 = vld [vmem:[%s72 + $0x10] sm:$0xff]
    %v489 = vld [vmem:[%s72 + $0x18] sm:$0xff]
    %v490 = vld [vmem:[%s72 + $0x20] sm:$0xff]
    %v491 = vld [vmem:[%s72 + $0x28] sm:$0xff]
    %v492 = vld [vmem:[%s72 + $0x30] sm:$0xff]
    %v493 = vld [vmem:[%s72 + $0x38] sm:$0xff]
    %v494 = vsel %vm86, %v486, 0.0
    %495 = vadd.xlane.f32.xlu0 %v494
    %v496 = vpop.xlane.xlu0 %495
    %v497 = vsel %vm86, %v487, 0.0
    %498 = vadd.xlane.f32.xlu0 %v497
    %v499 = vpop.xlane.xlu0 %498
    %v500 = vsel %vm86, %v488, 0.0
    %501 = vadd.xlane.f32.xlu0 %v500
    %v502 = vpop.xlane.xlu0 %501
    %v503 = vsel %vm86, %v489, 0.0
    %504 = vadd.xlane.f32.xlu0 %v503
    %v505 = vpop.xlane.xlu0 %504
    %v506 = vsel %vm86, %v490, 0.0
    %507 = vadd.xlane.f32.xlu0 %v506
    %v508 = vpop.xlane.xlu0 %507
    %v509 = vsel %vm86, %v491, 0.0
    %510 = vadd.xlane.f32.xlu0 %v509
    %v511 = vpop.xlane.xlu0 %510
    %v512 = vsel %vm86, %v492, 0.0
    %513 = vadd.xlane.f32.xlu0 %v512
    %v514 = vpop.xlane.xlu0 %513
    %v515 = vsel %vm86, %v493, 0.0
    %516 = vadd.xlane.f32.xlu0 %v515
    %v517 = vpop.xlane.xlu0 %516
    %v518 = vmul.f32 %v496, %v111
    %v519 = vmul.f32 %v499, %v111
    %v520 = vmul.f32 %v502, %v111
    %v521 = vmul.f32 %v505, %v111
    %v522 = vmul.f32 %v508, %v111
    %v523 = vmul.f32 %v511, %v111
    %v524 = vmul.f32 %v514, %v111
    %v525 = vmul.f32 %v517, %v111
    %v526 = vsub.f32 %v486, %v518
    %v527 = vsub.f32 %v487, %v519
    %v528 = vsub.f32 %v488, %v520
    %v529 = vsub.f32 %v489, %v521
    %v530 = vsub.f32 %v490, %v522
    %v531 = vsub.f32 %v491, %v523
    %v532 = vsub.f32 %v492, %v524
    %v533 = vsub.f32 %v493, %v525
    %v534 = vmul.f32 %v526, %v526
    %v535 = vmul.f32 %v527, %v527
    %v536 = vmul.f32 %v528, %v528
    %v537 = vmul.f32 %v529, %v529
    %v538 = vmul.f32 %v530, %v530
    %v539 = vmul.f32 %v531, %v531
    %v540 = vmul.f32 %v532, %v532
    %v541 = vmul.f32 %v533, %v533
    %v542 = vsel %vm86, %v534, 0.0
    %543 = vadd.xlane.f32.xlu0 %v542
    %v544 = vpop.xlane.xlu0 %543
    %v545 = vsel %vm86, %v535, 0.0
    %546 = vadd.xlane.f32.xlu0 %v545
    %v547 = vpop.xlane.xlu0 %546
    %v548 = vsel %vm86, %v536, 0.0
    %549 = vadd.xlane.f32.xlu0 %v548
    %v550 = vpop.xlane.xlu0 %549
    %v551 = vsel %vm86, %v537, 0.0
    %552 = vadd.xlane.f32.xlu0 %v551
    %v553 = vpop.xlane.xlu0 %552
    %v554 = vsel %vm86, %v538, 0.0
    %555 = vadd.xlane.f32.xlu0 %v554
    %v556 = vpop.xlane.xlu0 %555
    %v557 = vsel %vm86, %v539, 0.0
    %558 = vadd.xlane.f32.xlu0 %v557
    %v559 = vpop.xlane.xlu0 %558
    %v560 = vsel %vm86, %v540, 0.0
    %561 = vadd.xlane.f32.xlu0 %v560
    %v562 = vpop.xlane.xlu0 %561
    %v563 = vsel %vm86, %v541, 0.0
    %564 = vadd.xlane.f32.xlu0 %v563
    %v565 = vpop.xlane.xlu0 %564
    %v566 = vmul.f32 %v544, %v111
    %v567 = vmul.f32 %v547, %v111
    %v568 = vmul.f32 %v550, %v111
    %v569 = vmul.f32 %v553, %v111
    %v570 = vmul.f32 %v556, %v111
    %v571 = vmul.f32 %v559, %v111
    %v572 = vmul.f32 %v562, %v111
    %v573 = vmul.f32 %v565, %v111
    %v574 = vadd.f32 %v566, 1e-05
    %v575 = vadd.f32 %v567, 1e-05
    %v576 = vadd.f32 %v568, 1e-05
    %v577 = vadd.f32 %v569, 1e-05
    %v578 = vadd.f32 %v570, 1e-05
    %v579 = vadd.f32 %v571, 1e-05
    %v580 = vadd.f32 %v572, 1e-05
    %v581 = vadd.f32 %v573, 1e-05
    %v582 = vrsqrt.pop %v574
    %v583 = vrsqrt.pop %v575
    %v584 = vrsqrt.pop %v576
    %v585 = vrsqrt.pop %v577
    %v586 = vrsqrt.pop %v578
    %v587 = vrsqrt.pop %v579
    %v588 = vrsqrt.pop %v580
    %v589 = vrsqrt.pop %v581
    %v590 = vmul.f32 %v526, %v582
    %v591 = vmul.f32 %v527, %v583
    %v592 = vmul.f32 %v528, %v584
    %v593 = vmul.f32 %v529, %v585
    %v594 = vmul.f32 %v530, %v586
    %v595 = vmul.f32 %v531, %v587
    %v596 = vmul.f32 %v532, %v588
    %v597 = vmul.f32 %v533, %v589
    %v598 = vld [vmem:[%s3] sm:$0x1]
    %v600 = vlaneseq
    %v601 = vshrl.u32 %v600, 7
    %v602 = vsub.s32 0, %v601
    %v603 = vrot.slane %v598, %v602
    %v605 = vmul.f32 %v590, %v603
    %v606 = vmul.f32 %v591, %v603
    %v607 = vmul.f32 %v592, %v603
    %v608 = vmul.f32 %v593, %v603
    %v609 = vmul.f32 %v594, %v603
    %v610 = vmul.f32 %v595, %v603
    %v611 = vmul.f32 %v596, %v603
    %v612 = vmul.f32 %v597, %v603
    %v613 = vld [vmem:[%s4] sm:$0x1]
    %v615 = vlaneseq
    %v616 = vshrl.u32 %v615, 7
    %v617 = vsub.s32 0, %v616
    %v618 = vrot.slane %v613, %v617
    %v620 = vadd.f32 %v605, %v618
    %v621 = vadd.f32 %v606, %v618
    %v622 = vadd.f32 %v607, %v618
    %v623 = vadd.f32 %v608, %v618
    %v624 = vadd.f32 %v609, %v618
    %v625 = vadd.f32 %v610, %v618
    %v626 = vadd.f32 %v611, %v618
    %v627 = vadd.f32 %v612, %v618
    %v628 = vpack.c.bf16 %v621, %v620
    %v629 = vpack.c.bf16 %v623, %v622
    %v630 = vpack.c.bf16 %v625, %v624
    %v631 = vpack.c.bf16 %v627, %v626
    %v632 = vld [vmem:[%s7] sm:$0xff]
    %v633 = vld [vmem:[%s7 + $0x8] sm:$0xff]
    %v634 = vld [vmem:[%s7 + $0x10] sm:$0xff]
    %v635 = vld [vmem:[%s7 + $0x18] sm:$0xff]
    %v636 = vld [vmem:[%s7 + $0x20] sm:$0xff]
    %v637 = vld [vmem:[%s7 + $0x28] sm:$0xff]
    %v638 = vld [vmem:[%s7 + $0x30] sm:$0xff]
    %v639 = vld [vmem:[%s7 + $0x38] sm:$0xff]
    %v640 = vld [vmem:[%s8] sm:$0xf]
    %v642 = vlaneseq
    %v643 = vshrl.u32 %v642, 7
    %v644 = vsub.s32 0, %v643
    %v645 = vrot.slane %v640, %v644
    %v646 = vlaneseq
    %v647 = vshrl.u32 %v646, 7
    %v648 = vsub.s32 1, %v647
    %v649 = vrot.slane %v640, %v648
    %v650 = vlaneseq
    %v651 = vshrl.u32 %v650, 7
    %v652 = vsub.s32 2, %v651
    %v653 = vrot.slane %v640, %v652
    %v654 = vlaneseq
    %v655 = vshrl.u32 %v654, 7
    %v656 = vsub.s32 3, %v655
    %v657 = vrot.slane %v640, %v656
    %v670 = vunpack.c.l.b16 %v632
    %v671 = vunpack.c.h.b16 %v632
    %v672 = vunpack.c.l.b16 %v633
    %v673 = vunpack.c.h.b16 %v633
    %v674 = vunpack.c.l.b16 %v634
    %v675 = vunpack.c.h.b16 %v634
    %v676 = vunpack.c.l.b16 %v635
    %v677 = vunpack.c.h.b16 %v635
    %v678 = vunpack.c.l.b16 %v636
    %v679 = vunpack.c.h.b16 %v636
    %v680 = vunpack.c.l.b16 %v637
    %v681 = vunpack.c.h.b16 %v637
    %v682 = vunpack.c.l.b16 %v638
    %v683 = vunpack.c.h.b16 %v638
    %v684 = vunpack.c.l.b16 %v639
    %v685 = vunpack.c.h.b16 %v639
    %v686 = vpack.c.b16 %v674, %v670
    %v687 = vpack.c.b16 %v675, %v671
    %v688 = vpack.c.b16 %v676, %v672
    %v689 = vpack.c.b16 %v677, %v673
    %v690 = vpack.c.b16 %v682, %v678
    %v691 = vpack.c.b16 %v683, %v679
    %v692 = vpack.c.b16 %v684, %v680
    %v693 = vpack.c.b16 %v685, %v681
    %v703 = vsel %vm86, %v628, 0
    %v706 = vsel %vm86, %v629, 0
    %v709 = vsel %vm86, %v630, 0
    %v712 = vsel %vm86, %v631, 0
    %714 = vmatprep.subr.bf16.mxu0 %v687
    %715 = vmatpush1.bf16.msra.mxu0 %v686
    %716 = vmatprep.subr.bf16.mxu0 %v691
    %717 = vmatpush1.bf16.msra.mxu0 %v690
    %718 = vmatprep.subr.bf16.mxu0 0
    %719 = vmatpush1.bf16.msra.mxu0 0
    %720 = vmatprep.subr.bf16.mxu0 0
    %721 = vmatpush1.bf16.msra.mxu0 0
    %722 = vmatprep.subr.bf16.mxu0 0
    %723 = vmatpush1.bf16.msra.mxu0 0
    %724 = vmatprep.subr.bf16.mxu0 0
    %725 = vmatpush1.bf16.msra.mxu0 0
    %726 = vmatprep.subr.bf16.mxu0 0
    %727 = vmatpush1.bf16.msra.mxu0 0
    %728 = vmatprep.subr.bf16.mxu0 0
    %729 = vmatpush1.bf16.msra.mxu0 0
    %730 = vmatprep.subr.bf16.mxu0 0
    %731 = vmatpush1.bf16.msra.mxu0 0
    %732 = vmatprep.subr.bf16.mxu0 0
    %733 = vmatpush1.bf16.msra.mxu0 0
    %734 = vmatprep.subr.bf16.mxu0 0
    %735 = vmatpush1.bf16.msra.mxu0 0
    %736 = vmatprep.subr.bf16.mxu0 0
    %737 = vmatpush1.bf16.msra.mxu0 0
    %738 = vmatprep.subr.bf16.mxu0 0
    %739 = vmatpush1.bf16.msra.mxu0 0
    %740 = vmatprep.subr.bf16.mxu0 0
    %741 = vmatpush1.bf16.msra.mxu0 0
    %742 = vmatprep.subr.bf16.mxu0 0
    %743 = vmatpush1.bf16.msra.mxu0 0
    %744 = vmatprep.subr.bf16.mxu0 0
    %745 = vmatpush1.bf16.msra.mxu0 0
    %746 = vmatprep.mubr.bf16.mxu0 0
    %747 = vmatmul.mubr.bf16.gmra.mrb[0].mxu0 %v703
    %v748 = vpop.f32.mrb[0].mxu0
    %v749 = vadd.f32 %v645, %v748
    %v750 = vpop.f32.mrb[0].mxu0
    %v751 = vadd.f32 %v649, %v750
    %v752 = vpop.f32.mrb[0].mxu0
    %v753 = vadd.f32 %v645, %v752
    %v754 = vpop.f32.mrb[0].mxu0
    %v755 = vadd.f32 %v649, %v754
    %756 = vmatprep.mubr.bf16.mxu0 0
    %757 = vmatmul.mubr.bf16.gmra.mrb[0].mxu0 %v706
    %v758 = vpop.f32.mrb[0].mxu0
    %v759 = vadd.f32 %v645, %v758
    %v760 = vpop.f32.mrb[0].mxu0
    %v761 = vadd.f32 %v649, %v760
    %v762 = vpop.f32.mrb[0].mxu0
    %v763 = vadd.f32 %v645, %v762
    %v764 = vpop.f32.mrb[0].mxu0
    %v765 = vadd.f32 %v649, %v764
    %766 = vmatprep.mubr.bf16.mxu0 0
    %767 = vmatmul.mubr.bf16.gmra.mrb[0].mxu0 %v709
    %v768 = vpop.f32.mrb[0].mxu0
    %v769 = vadd.f32 %v645, %v768
    %v770 = vpop.f32.mrb[0].mxu0
    %v771 = vadd.f32 %v649, %v770
    %v772 = vpop.f32.mrb[0].mxu0
    %v773 = vadd.f32 %v645, %v772
    %v774 = vpop.f32.mrb[0].mxu0
    %v775 = vadd.f32 %v649, %v774
    %776 = vmatprep.mubr.bf16.mxu0 0
    %777 = vmatmul.mubr.bf16.gmra.mrb[0].mxu0 %v712
    %v778 = vpop.f32.mrb[0].mxu0
    %v779 = vadd.f32 %v645, %v778
    %v780 = vpop.f32.mrb[0].mxu0
    %v781 = vadd.f32 %v649, %v780
    %v782 = vpop.f32.mrb[0].mxu0
    %v783 = vadd.f32 %v645, %v782
    %v784 = vpop.f32.mrb[0].mxu0
    %v785 = vadd.f32 %v649, %v784
    %786 = vdwg.mxu0
    %787 = vmatprep.subr.bf16.mxu0 %v689
    %788 = vmatpush1.bf16.msra.mxu0 %v688
    %789 = vmatprep.subr.bf16.mxu0 %v693
    %790 = vmatpush1.bf16.msra.mxu0 %v692
    %791 = vmatprep.subr.bf16.mxu0 0
    %792 = vmatpush1.bf16.msra.mxu0 0
    %793 = vmatprep.subr.bf16.mxu0 0
    %794 = vmatpush1.bf16.msra.mxu0 0
    %795 = vmatprep.subr.bf16.mxu0 0
    %796 = vmatpush1.bf16.msra.mxu0 0
    %797 = vmatprep.subr.bf16.mxu0 0
    %798 = vmatpush1.bf16.msra.mxu0 0
    %799 = vmatprep.subr.bf16.mxu0 0
    %800 = vmatpush1.bf16.msra.mxu0 0
    %801 = vmatprep.subr.bf16.mxu0 0
    %802 = vmatpush1.bf16.msra.mxu0 0
    %803 = vmatprep.subr.bf16.mxu0 0
    %804 = vmatpush1.bf16.msra.mxu0 0
    %805 = vmatprep.subr.bf16.mxu0 0
    %806 = vmatpush1.bf16.msra.mxu0 0
    %807 = vmatprep.subr.bf16.mxu0 0
    %808 = vmatpush1.bf16.msra.mxu0 0
    %809 = vmatprep.subr.bf16.mxu0 0
    %810 = vmatpush1.bf16.msra.mxu0 0
    %811 = vmatprep.subr.bf16.mxu0 0
    %812 = vmatpush1.bf16.msra.mxu0 0
    %813 = vmatprep.subr.bf16.mxu0 0
    %814 = vmatpush1.bf16.msra.mxu0 0
    %815 = vmatprep.subr.bf16.mxu0 0
    %816 = vmatpush1.bf16.msra.mxu0 0
    %817 = vmatprep.subr.bf16.mxu0 0
    %818 = vmatpush1.bf16.msra.mxu0 0
    %819 = vmatprep.mubr.bf16.mxu0 0
    %820 = vmatmul.mubr.bf16.gmra.mrb[0].mxu0 %v703
    %v821 = vpop.f32.mrb[0].mxu0
    %v822 = vadd.f32 %v653, %v821
    %v823 = vpop.f32.mrb[0].mxu0
    %v824 = vadd.f32 %v657, %v823
    %v825 = vpop.f32.mrb[0].mxu0
    %v826 = vadd.f32 %v653, %v825
    %v827 = vpop.f32.mrb[0].mxu0
    %v828 = vadd.f32 %v657, %v827
    %829 = vmatprep.mubr.bf16.mxu0 0
    %830 = vmatmul.mubr.bf16.gmra.mrb[0].mxu0 %v706
    %v831 = vpop.f32.mrb[0].mxu0
    %v832 = vadd.f32 %v653, %v831
    %v833 = vpop.f32.mrb[0].mxu0
    %v834 = vadd.f32 %v657, %v833
    %v835 = vpop.f32.mrb[0].mxu0
    %v836 = vadd.f32 %v653, %v835
    %v837 = vpop.f32.mrb[0].mxu0
    %v838 = vadd.f32 %v657, %v837
    %839 = vmatprep.mubr.bf16.mxu0 0
    %840 = vmatmul.mubr.bf16.gmra.mrb[0].mxu0 %v709
    %v841 = vpop.f32.mrb[0].mxu0
    %v842 = vadd.f32 %v653, %v841
    %v843 = vpop.f32.mrb[0].mxu0
    %v844 = vadd.f32 %v657, %v843
    %v845 = vpop.f32.mrb[0].mxu0
    %v846 = vadd.f32 %v653, %v845
    %v847 = vpop.f32.mrb[0].mxu0
    %v848 = vadd.f32 %v657, %v847
    %849 = vmatprep.mubr.bf16.mxu0 0
    %850 = vmatmul.mubr.bf16.gmra.mrb[0].mxu0 %v712
    %v851 = vpop.f32.mrb[0].mxu0
    %v852 = vadd.f32 %v653, %v851
    %v853 = vpop.f32.mrb[0].mxu0
    %v854 = vadd.f32 %v657, %v853
    %v855 = vpop.f32.mrb[0].mxu0
    %v856 = vadd.f32 %v653, %v855
    %v857 = vpop.f32.mrb[0].mxu0
    %v858 = vadd.f32 %v657, %v857
    %859 = vdwg.mxu0
    %860 = vst [vmem:[#allocation3] sm:$0xff] %v749
    %861 = vst [vmem:[#allocation3 + $0x8] sm:$0xff] %v751
    %862 = vst [vmem:[#allocation3 + $0x10] sm:$0xff] %v822
    %863 = vst [vmem:[#allocation3 + $0x18] sm:$0xff] %v824
    %864 = vst [vmem:[#allocation3 + $0x20] sm:$0xff] %v753
    %865 = vst [vmem:[#allocation3 + $0x28] sm:$0xff] %v755
    %866 = vst [vmem:[#allocation3 + $0x30] sm:$0xff] %v826
    %867 = vst [vmem:[#allocation3 + $0x38] sm:$0xff] %v828
    %868 = vst [vmem:[#allocation3 + $0x40] sm:$0xff] %v759
    %869 = vst [vmem:[#allocation3 + $0x48] sm:$0xff] %v761
    %870 = vst [vmem:[#allocation3 + $0x50] sm:$0xff] %v832
    %871 = vst [vmem:[#allocation3 + $0x58] sm:$0xff] %v834
    %872 = vst [vmem:[#allocation3 + $0x60] sm:$0xff] %v763
    %873 = vst [vmem:[#allocation3 + $0x68] sm:$0xff] %v765
    %874 = vst [vmem:[#allocation3 + $0x70] sm:$0xff] %v836
    %875 = vst [vmem:[#allocation3 + $0x78] sm:$0xff] %v838
    %876 = vst [vmem:[#allocation3 + $0x80] sm:$0xff] %v769
    %877 = vst [vmem:[#allocation3 + $0x88] sm:$0xff] %v771
    %878 = vst [vmem:[#allocation3 + $0x90] sm:$0xff] %v842
    %879 = vst [vmem:[#allocation3 + $0x98] sm:$0xff] %v844
    %880 = vst [vmem:[#allocation3 + $0xa0] sm:$0xff] %v773
    %881 = vst [vmem:[#allocation3 + $0xa8] sm:$0xff] %v775
    %882 = vst [vmem:[#allocation3 + $0xb0] sm:$0xff] %v846
    %883 = vst [vmem:[#allocation3 + $0xb8] sm:$0xff] %v848
    %884 = vst [vmem:[#allocation3 + $0xc0] sm:$0xff] %v779
    %885 = vst [vmem:[#allocation3 + $0xc8] sm:$0xff] %v781
    %886 = vst [vmem:[#allocation3 + $0xd0] sm:$0xff] %v852
    %887 = vst [vmem:[#allocation3 + $0xd8] sm:$0xff] %v854
    %888 = vst [vmem:[#allocation3 + $0xe0] sm:$0xff] %v783
    %889 = vst [vmem:[#allocation3 + $0xe8] sm:$0xff] %v785
    %890 = vst [vmem:[#allocation3 + $0xf0] sm:$0xff] %v856
    %891 = vst [vmem:[#allocation3 + $0xf8] sm:$0xff] %v858
    %p892 = scmp.eq.s32.totalorder 0, 0
    // Predicated region
    $region46: #{tpu_custom_call.1} parent=1 // pred_check
      %p893 = pneg %p892
    $region47: #{tpu_custom_call.1} parent=1 // pred_check_branch
      %895 = sbr.rel (%p893) target = $region49
    $region48: #{tpu_custom_call.1} parent=1 // pred_region
      %896 = vst [vmem:[#allocation4] sm:$0xff] 0.0
      %897 = vst [vmem:[#allocation4 + $0x8] sm:$0xff] 0.0
      %898 = vst [vmem:[#allocation5] sm:$0xff] 0.0
      %899 = vst [vmem:[#allocation5 + $0x8] sm:$0xff] 0.0
    $region49: #{tpu_custom_call.1} parent=1 // pred_fallthru
      _
    %v900 = vld [vmem:[%s0] sm:$0xff]
    loop: start=0, step=1, limit=8
    $region50: #{tpu_custom_call.1} parent=1 // loop_pre_header
      _
    $region51: #{tpu_custom_call.1} parent=1 // loop_header
      %s902 = sphi 0, %s906
      %p903 = scmp.ge.s32.totalorder %s902, 8
    $region52: #{tpu_custom_call.1} parent=1 // loop_header_branch
      %905 = sbr.rel (%p903) target = $region56
    $region53: #{tpu_custom_call.1} parent=1 // loop_body
      %s907 = smul.u32 0, 8
      %s908 = sadd.s32 %s907, %s902
      %s909 = ssub.s32 7, %s908
      %s910 = smul.u32 %s902, 8
      %s911 = ssub.s32 7, %s902
      %s912 = smul.u32 %s911, 8
      %v913 = vld [vmem:[#allocation4] sm:$0xff]
      %v914 = vld [vmem:[#allocation4 + $0x8] sm:$0xff]
      %v915 = vld [vmem:[#allocation5] sm:$0xff]
      %v916 = vld [vmem:[#allocation5 + $0x8] sm:$0xff]
      %v917 = vpack.c.bf16 %v913, %v913
      %v918 = vpack.c.bf16 %v914, %v914
      %v919 = vld [vmem:[#allocation6] sm:$0xff]
      %v920 = vld [vmem:[#allocation6 + $0x8] sm:$0xff]
      %v921 = vld [vmem:[#allocation6 + $0x10] sm:$0xff]
      %v922 = vld [vmem:[#allocation6 + $0x18] sm:$0xff]
      %v923 = vld [vmem:[#allocation6 + $0x20] sm:$0xff]
      %v924 = vld [vmem:[#allocation6 + $0x28] sm:$0xff]
      %v925 = vld [vmem:[#allocation6 + $0x30] sm:$0xff]
      %v926 = vld [vmem:[#allocation6 + $0x38] sm:$0xff]
      %v927 = vld [vmem:[#allocation6 + $0x40] sm:$0xff]
      %v928 = vld [vmem:[#allocation6 + $0x48] sm:$0xff]
      %v929 = vld [vmem:[#allocation6 + $0x50] sm:$0xff]
      %v930 = vld [vmem:[#allocation6 + $0x58] sm:$0xff]
      %v931 = vld [vmem:[#allocation6 + $0x60] sm:$0xff]
      %v932 = vld [vmem:[#allocation6 + $0x68] sm:$0xff]
      %v933 = vld [vmem:[#allocation6 + $0x70] sm:$0xff]
      %v934 = vld [vmem:[#allocation6 + $0x78] sm:$0xff]
      %v935 = vld [vmem:[#allocation6 + $0x80] sm:$0xff]
      %v936 = vld [vmem:[#allocation6 + $0x88] sm:$0xff]
      %v937 = vld [vmem:[#allocation6 + $0x90] sm:$0xff]
      %v938 = vld [vmem:[#allocation6 + $0x98] sm:$0xff]
      %v939 = vld [vmem:[#allocation6 + $0xa0] sm:$0xff]
      %v940 = vld [vmem:[#allocation6 + $0xa8] sm:$0xff]
      %v941 = vld [vmem:[#allocation6 + $0xb0] sm:$0xff]
      %v942 = vld [vmem:[#allocation6 + $0xb8] sm:$0xff]
      %v943 = vld [vmem:[#allocation6 + $0xc0] sm:$0xff]
      %v944 = vld [vmem:[#allocation6 + $0xc8] sm:$0xff]
      %v945 = vld [vmem:[#allocation6 + $0xd0] sm:$0xff]
      %v946 = vld [vmem:[#allocation6 + $0xd8] sm:$0xff]
      %v947 = vld [vmem:[#allocation6 + $0xe0] sm:$0xff]
      %v948 = vld [vmem:[#allocation6 + $0xe8] sm:$0xff]
      %v949 = vld [vmem:[#allocation6 + $0xf0] sm:$0xff]
      %v950 = vld [vmem:[#allocation6 + $0xf8] sm:$0xff]
      %v951 = vld [vmem:[#allocation6 + $0x100] sm:$0xff]
      %v952 = vld [vmem:[#allocation6 + $0x108] sm:$0xff]
      %v953 = vld [vmem:[#allocation6 + $0x110] sm:$0xff]
      %v954 = vld [vmem:[#allocation6 + $0x118] sm:$0xff]
      %v955 = vld [vmem:[#allocation6 + $0x120] sm:$0xff]
      %v956 = vld [vmem:[#allocation6 + $0x128] sm:$0xff]
      %v957 = vld [vmem:[#allocation6 + $0x130] sm:$0xff]
      %v958 = vld [vmem:[#allocation6 + $0x138] sm:$0xff]
      %v959 = vld [vmem:[#allocation6 + $0x140] sm:$0xff]
      %v960 = vld [vmem:[#allocation6 + $0x148] sm:$0xff]
      %v961 = vld [vmem:[#allocation6 + $0x150] sm:$0xff]
      %v962 = vld [vmem:[#allocation6 + $0x158] sm:$0xff]
      %v963 = vld [vmem:[#allocation6 + $0x160] sm:$0xff]
      %v964 = vld [vmem:[#allocation6 + $0x168] sm:$0xff]
      %v965 = vld [vmem:[#allocation6 + $0x170] sm:$0xff]
      %v966 = vld [vmem:[#allocation6 + $0x178] sm:$0xff]
      %v967 = vld [vmem:[#allocation6 + $0x180] sm:$0xff]
      %v968 = vld [vmem:[#allocation6 + $0x188] sm:$0xff]
      %v969 = vld [vmem:[#allocation6 + $0x190] sm:$0xff]
      %v970 = vld [vmem:[#allocation6 + $0x198] sm:$0xff]
      %v971 = vld [vmem:[#allocation6 + $0x1a0] sm:$0xff]
      %v972 = vld [vmem:[#allocation6 + $0x1a8] sm:$0xff]
      %v973 = vld [vmem:[#allocation6 + $0x1b0] sm:$0xff]
      %v974 = vld [vmem:[#allocation6 + $0x1b8] sm:$0xff]
      %v975 = vld [vmem:[#allocation6 + $0x1c0] sm:$0xff]
      %v976 = vld [vmem:[#allocation6 + $0x1c8] sm:$0xff]
      %v977 = vld [vmem:[#allocation6 + $0x1d0] sm:$0xff]
      %v978 = vld [vmem:[#allocation6 + $0x1d8] sm:$0xff]
      %v979 = vld [vmem:[#allocation6 + $0x1e0] sm:$0xff]
      %v980 = vld [vmem:[#allocation6 + $0x1e8] sm:$0xff]
      %v981 = vld [vmem:[#allocation6 + $0x1f0] sm:$0xff]
      %v982 = vld [vmem:[#allocation6 + $0x1f8] sm:$0xff]
      %v983 = vld [vmem:[#allocation6 + $0x200] sm:$0xff]
      %v984 = vld [vmem:[#allocation6 + $0x208] sm:$0xff]
      %v985 = vld [vmem:[#allocation6 + $0x210] sm:$0xff]
      %v986 = vld [vmem:[#allocation6 + $0x218] sm:$0xff]
      %v987 = vld [vmem:[#allocation6 + $0x220] sm:$0xff]
      %v988 = vld [vmem:[#allocation6 + $0x228] sm:$0xff]
      %v989 = vld [vmem:[#allocation6 + $0x230] sm:$0xff]
      %v990 = vld [vmem:[#allocation6 + $0x238] sm:$0xff]
      %v991 = vld [vmem:[#allocation6 + $0x240] sm:$0xff]
      %v992 = vld [vmem:[#allocation6 + $0x248] sm:$0xff]
      %v993 = vld [vmem:[#allocation6 + $0x250] sm:$0xff]
      %v994 = vld [vmem:[#allocation6 + $0x258] sm:$0xff]
      %v995 = vld [vmem:[#allocation6 + $0x260] sm:$0xff]
      %v996 = vld [vmem:[#allocation6 + $0x268] sm:$0xff]
      %v997 = vld [vmem:[#allocation6 + $0x270] sm:$0xff]
      %v998 = vld [vmem:[#allocation6 + $0x278] sm:$0xff]
      %v999 = vld [vmem:[#allocation6 + $0x280] sm:$0xff]
      %v1000 = vld [vmem:[#allocation6 + $0x288] sm:$0xff]
      %v1001 = vld [vmem:[#allocation6 + $0x290] sm:$0xff]
      %v1002 = vld [vmem:[#allocation6 + $0x298] sm:$0xff]
      %v1003 = vld [vmem:[#allocation6 + $0x2a0] sm:$0xff]
      %v1004 = vld [vmem:[#allocation6 + $0x2a8] sm:$0xff]
      %v1005 = vld [vmem:[#allocation6 + $0x2b0] sm:$0xff]
      %v1006 = vld [vmem:[#allocation6 + $0x2b8] sm:$0xff]
      %v1007 = vld [vmem:[#allocation6 + $0x2c0] sm:$0xff]
      %v1008 = vld [vmem:[#allocation6 + $0x2c8] sm:$0xff]
      %v1009 = vld [vmem:[#allocation6 + $0x2d0] sm:$0xff]
      %v1010 = vld [vmem:[#allocation6 + $0x2d8] sm:$0xff]
      %v1011 = vld [vmem:[#allocation6 + $0x2e0] sm:$0xff]
      %v1012 = vld [vmem:[#allocation6 + $0x2e8] sm:$0xff]
      %v1013 = vld [vmem:[#allocation6 + $0x2f0] sm:$0xff]
      %v1014 = vld [vmem:[#allocation6 + $0x2f8] sm:$0xff]
      %v1015 = vld [vmem:[#allocation6 + $0x300] sm:$0xff]
      %v1016 = vld [vmem:[#allocation6 + $0x308] sm:$0xff]
      %v1017 = vld [vmem:[#allocation6 + $0x310] sm:$0xff]
      %v1018 = vld [vmem:[#allocation6 + $0x318] sm:$0xff]
      %v1019 = vld [vmem:[#allocation6 + $0x320] sm:$0xff]
      %v1020 = vld [vmem:[#allocation6 + $0x328] sm:$0xff]
      %v1021 = vld [vmem:[#allocation6 + $0x330] sm:$0xff]
      %v1022 = vld [vmem:[#allocation6 + $0x338] sm:$0xff]
      %v1023 = vld [vmem:[#allocation6 + $0x340] sm:$0xff]
      %v1024 = vld [vmem:[#allocation6 + $0x348] sm:$0xff]
      %v1025 = vld [vmem:[#allocation6 + $0x350] sm:$0xff]
      %v1026 = vld [vmem:[#allocation6 + $0x358] sm:$0xff]
      %v1027 = vld [vmem:[#allocation6 + $0x360] sm:$0xff]
      %v1028 = vld [vmem:[#allocation6 + $0x368] sm:$0xff]
      %v1029 = vld [vmem:[#allocation6 + $0x370] sm:$0xff]
      %v1030 = vld [vmem:[#allocation6 + $0x378] sm:$0xff]
      %v1031 = vld [vmem:[#allocation6 + $0x380] sm:$0xff]
      %v1032 = vld [vmem:[#allocation6 + $0x388] sm:$0xff]
      %v1033 = vld [vmem:[#allocation6 + $0x390] sm:$0xff]
      %v1034 = vld [vmem:[#allocation6 + $0x398] sm:$0xff]
      %v1035 = vld [vmem:[#allocation6 + $0x3a0] sm:$0xff]
      %v1036 = vld [vmem:[#allocation6 + $0x3a8] sm:$0xff]
      %v1037 = vld [vmem:[#allocation6 + $0x3b0] sm:$0xff]
      %v1038 = vld [vmem:[#allocation6 + $0x3b8] sm:$0xff]
      %v1039 = vld [vmem:[#allocation6 + $0x3c0] sm:$0xff]
      %v1040 = vld [vmem:[#allocation6 + $0x3c8] sm:$0xff]
      %v1041 = vld [vmem:[#allocation6 + $0x3d0] sm:$0xff]
      %v1042 = vld [vmem:[#allocation6 + $0x3d8] sm:$0xff]
      %v1043 = vld [vmem:[#allocation6 + $0x3e0] sm:$0xff]
      %v1044 = vld [vmem:[#allocation6 + $0x3e8] sm:$0xff]
      %v1045 = vld [vmem:[#allocation6 + $0x3f0] sm:$0xff]
      %v1046 = vld [vmem:[#allocation6 + $0x3f8] sm:$0xff]
      %v1175 = vunpack.c.l.b16 %v919
      %v1176 = vunpack.c.h.b16 %v919
      %v1177 = vunpack.c.l.b16 %v920
      %v1178 = vunpack.c.h.b16 %v920
      %v1179 = vunpack.c.l.b16 %v921
      %v1180 = vunpack.c.h.b16 %v921
      %v1181 = vunpack.c.l.b16 %v922
      %v1182 = vunpack.c.h.b16 %v922
      %v1183 = vunpack.c.l.b16 %v923
      %v1184 = vunpack.c.h.b16 %v923
      %v1185 = vunpack.c.l.b16 %v924
      %v1186 = vunpack.c.h.b16 %v924
      %v1187 = vunpack.c.l.b16 %v925
      %v1188 = vunpack.c.h.b16 %v925
      %v1189 = vunpack.c.l.b16 %v926
      %v1190 = vunpack.c.h.b16 %v926
      %v1191 = vunpack.c.l.b16 %v927
      %v1192 = vunpack.c.h.b16 %v927
      %v1193 = vunpack.c.l.b16 %v928
      %v1194 = vunpack.c.h.b16 %v928
      %v1195 = vunpack.c.l.b16 %v929
      %v1196 = vunpack.c.h.b16 %v929
      %v1197 = vunpack.c.l.b16 %v930
      %v1198 = vunpack.c.h.b16 %v930
      %v1199 = vunpack.c.l.b16 %v931
      %v1200 = vunpack.c.h.b16 %v931
      %v1201 = vunpack.c.l.b16 %v932
      %v1202 = vunpack.c.h.b16 %v932
      %v1203 = vunpack.c.l.b16 %v933
      %v1204 = vunpack.c.h.b16 %v933
      %v1205 = vunpack.c.l.b16 %v934
      %v1206 = vunpack.c.h.b16 %v934
      %v1207 = vunpack.c.l.b16 %v935
      %v1208 = vunpack.c.h.b16 %v935
      %v1209 = vunpack.c.l.b16 %v936
      %v1210 = vunpack.c.h.b16 %v936
      %v1211 = vunpack.c.l.b16 %v937
      %v1212 = vunpack.c.h.b16 %v937
      %v1213 = vunpack.c.l.b16 %v938
      %v1214 = vunpack.c.h.b16 %v938
      %v1215 = vunpack.c.l.b16 %v939
      %v1216 = vunpack.c.h.b16 %v939
      %v1217 = vunpack.c.l.b16 %v940
      %v1218 = vunpack.c.h.b16 %v940
      %v1219 = vunpack.c.l.b16 %v941
      %v1220 = vunpack.c.h.b16 %v941
      %v1221 = vunpack.c.l.b16 %v942
      %v1222 = vunpack.c.h.b16 %v942
      %v1223 = vunpack.c.l.b16 %v943
      %v1224 = vunpack.c.h.b16 %v943
      %v1225 = vunpack.c.l.b16 %v944
      %v1226 = vunpack.c.h.b16 %v944
      %v1227 = vunpack.c.l.b16 %v945
      %v1228 = vunpack.c.h.b16 %v945
      %v1229 = vunpack.c.l.b16 %v946
      %v1230 = vunpack.c.h.b16 %v946
      %v1231 = vunpack.c.l.b16 %v947
      %v1232 = vunpack.c.h.b16 %v947
      %v1233 = vunpack.c.l.b16 %v948
      %v1234 = vunpack.c.h.b16 %v948
      %v1235 = vunpack.c.l.b16 %v949
      %v1236 = vunpack.c.h.b16 %v949
      %v1237 = vunpack.c.l.b16 %v950
      %v1238 = vunpack.c.h.b16 %v950
      %v1239 = vunpack.c.l.b16 %v951
      %v1240 = vunpack.c.h.b16 %v951
      %v1241 = vunpack.c.l.b16 %v952
      %v1242 = vunpack.c.h.b16 %v952
      %v1243 = vunpack.c.l.b16 %v953
      %v1244 = vunpack.c.h.b16 %v953
      %v1245 = vunpack.c.l.b16 %v954
      %v1246 = vunpack.c.h.b16 %v954
      %v1247 = vunpack.c.l.b16 %v955
      %v1248 = vunpack.c.h.b16 %v955
      %v1249 = vunpack.c.l.b16 %v956
      %v1250 = vunpack.c.h.b16 %v956
      %v1251 = vunpack.c.l.b16 %v957
      %v1252 = vunpack.c.h.b16 %v957
      %v1253 = vunpack.c.l.b16 %v958
      %v1254 = vunpack.c.h.b16 %v958
      %v1255 = vunpack.c.l.b16 %v959
      %v1256 = vunpack.c.h.b16 %v959
      %v1257 = vunpack.c.l.b16 %v960
      %v1258 = vunpack.c.h.b16 %v960
      %v1259 = vunpack.c.l.b16 %v961
      %v1260 = vunpack.c.h.b16 %v961
      %v1261 = vunpack.c.l.b16 %v962
      %v1262 = vunpack.c.h.b16 %v962
      %v1263 = vunpack.c.l.b16 %v963
      %v1264 = vunpack.c.h.b16 %v963
      %v1265 = vunpack.c.l.b16 %v964
      %v1266 = vunpack.c.h.b16 %v964
      %v1267 = vunpack.c.l.b16 %v965
      %v1268 = vunpack.c.h.b16 %v965
      %v1269 = vunpack.c.l.b16 %v966
      %v1270 = vunpack.c.h.b16 %v966
      %v1271 = vunpack.c.l.b16 %v967
      %v1272 = vunpack.c.h.b16 %v967
      %v1273 = vunpack.c.l.b16 %v968
      %v1274 = vunpack.c.h.b16 %v968
      %v1275 = vunpack.c.l.b16 %v969
      %v1276 = vunpack.c.h.b16 %v969
      %v1277 = vunpack.c.l.b16 %v970
      %v1278 = vunpack.c.h.b16 %v970
      %v1279 = vunpack.c.l.b16 %v971
      %v1280 = vunpack.c.h.b16 %v971
      %v1281 = vunpack.c.l.b16 %v972
      %v1282 = vunpack.c.h.b16 %v972
      %v1283 = vunpack.c.l.b16 %v973
      %v1284 = vunpack.c.h.b16 %v973
      %v1285 = vunpack.c.l.b16 %v974
      %v1286 = vunpack.c.h.b16 %v974
      %v1287 = vunpack.c.l.b16 %v975
      %v1288 = vunpack.c.h.b16 %v975
      %v1289 = vunpack.c.l.b16 %v976
      %v1290 = vunpack.c.h.b16 %v976
      %v1291 = vunpack.c.l.b16 %v977
      %v1292 = vunpack.c.h.b16 %v977
      %v1293 = vunpack.c.l.b16 %v978
      %v1294 = vunpack.c.h.b16 %v978
      %v1295 = vunpack.c.l.b16 %v979
      %v1296 = vunpack.c.h.b16 %v979
      %v1297 = vunpack.c.l.b16 %v980
      %v1298 = vunpack.c.h.b16 %v980
      %v1299 = vunpack.c.l.b16 %v981
      %v1300 = vunpack.c.h.b16 %v981
      %v1301 = vunpack.c.l.b16 %v982
      %v1302 = vunpack.c.h.b16 %v982
      %v1303 = vunpack.c.l.b16 %v983
      %v1304 = vunpack.c.h.b16 %v983
      %v1305 = vunpack.c.l.b16 %v984
      %v1306 = vunpack.c.h.b16 %v984
      %v1307 = vunpack.c.l.b16 %v985
      %v1308 = vunpack.c.h.b16 %v985
      %v1309 = vunpack.c.l.b16 %v986
      %v1310 = vunpack.c.h.b16 %v986
      %v1311 = vunpack.c.l.b16 %v987
      %v1312 = vunpack.c.h.b16 %v987
      %v1313 = vunpack.c.l.b16 %v988
      %v1314 = vunpack.c.h.b16 %v988
      %v1315 = vunpack.c.l.b16 %v989
      %v1316 = vunpack.c.h.b16 %v989
      %v1317 = vunpack.c.l.b16 %v990
      %v1318 = vunpack.c.h.b16 %v990
      %v1319 = vunpack.c.l.b16 %v991
      %v1320 = vunpack.c.h.b16 %v991
      %v1321 = vunpack.c.l.b16 %v992
      %v1322 = vunpack.c.h.b16 %v992
      %v1323 = vunpack.c.l.b16 %v993
      %v1324 = vunpack.c.h.b16 %v993
      %v1325 = vunpack.c.l.b16 %v994
      %v1326 = vunpack.c.h.b16 %v994
      %v1327 = vunpack.c.l.b16 %v995
      %v1328 = vunpack.c.h.b16 %v995
      %v1329 = vunpack.c.l.b16 %v996
      %v1330 = vunpack.c.h.b16 %v996
      %v1331 = vunpack.c.l.b16 %v997
      %v1332 = vunpack.c.h.b16 %v997
      %v1333 = vunpack.c.l.b16 %v998
      %v1334 = vunpack.c.h.b16 %v998
      %v1335 = vunpack.c.l.b16 %v999
      %v1336 = vunpack.c.h.b16 %v999
      %v1337 = vunpack.c.l.b16 %v1000
      %v1338 = vunpack.c.h.b16 %v1000
      %v1339 = vunpack.c.l.b16 %v1001
      %v1340 = vunpack.c.h.b16 %v1001
      %v1341 = vunpack.c.l.b16 %v1002
      %v1342 = vunpack.c.h.b16 %v1002
      %v1343 = vunpack.c.l.b16 %v1003
      %v1344 = vunpack.c.h.b16 %v1003
      %v1345 = vunpack.c.l.b16 %v1004
      %v1346 = vunpack.c.h.b16 %v1004
      %v1347 = vunpack.c.l.b16 %v1005
      %v1348 = vunpack.c.h.b16 %v1005
      %v1349 = vunpack.c.l.b16 %v1006
      %v1350 = vunpack.c.h.b16 %v1006
      %v1351 = vunpack.c.l.b16 %v1007
      %v1352 = vunpack.c.h.b16 %v1007
      %v1353 = vunpack.c.l.b16 %v1008
      %v1354 = vunpack.c.h.b16 %v1008
      %v1355 = vunpack.c.l.b16 %v1009
      %v1356 = vunpack.c.h.b16 %v1009
      %v1357 = vunpack.c.l.b16 %v1010
      %v1358 = vunpack.c.h.b16 %v1010
      %v1359 = vunpack.c.l.b16 %v1011
      %v1360 = vunpack.c.h.b16 %v1011
      %v1361 = vunpack.c.l.b16 %v1012
      %v1362 = vunpack.c.h.b16 %v1012
      %v1363 = vunpack.c.l.b16 %v1013
      %v1364 = vunpack.c.h.b16 %v1013
      %v1365 = vunpack.c.l.b16 %v1014
      %v1366 = vunpack.c.h.b16 %v1014
      %v1367 = vunpack.c.l.b16 %v1015
      %v1368 = vunpack.c.h.b16 %v1015
      %v1369 = vunpack.c.l.b16 %v1016
      %v1370 = vunpack.c.h.b16 %v1016
      %v1371 = vunpack.c.l.b16 %v1017
      %v1372 = vunpack.c.h.b16 %v1017
      %v1373 = vunpack.c.l.b16 %v1018
      %v1374 = vunpack.c.h.b16 %v1018
      %v1375 = vunpack.c.l.b16 %v1019
      %v1376 = vunpack.c.h.b16 %v1019
      %v1377 = vunpack.c.l.b16 %v1020
      %v1378 = vunpack.c.h.b16 %v1020
      %v1379 = vunpack.c.l.b16 %v1021
      %v1380 = vunpack.c.h.b16 %v1021
      %v1381 = vunpack.c.l.b16 %v1022
      %v1382 = vunpack.c.h.b16 %v1022
      %v1383 = vunpack.c.l.b16 %v1023
      %v1384 = vunpack.c.h.b16 %v1023
      %v1385 = vunpack.c.l.b16 %v1024
      %v1386 = vunpack.c.h.b16 %v1024
      %v1387 = vunpack.c.l.b16 %v1025
      %v1388 = vunpack.c.h.b16 %v1025
      %v1389 = vunpack.c.l.b16 %v1026
      %v1390 = vunpack.c.h.b16 %v1026
      %v1391 = vunpack.c.l.b16 %v1027
      %v1392 = vunpack.c.h.b16 %v1027
      %v1393 = vunpack.c.l.b16 %v1028
      %v1394 = vunpack.c.h.b16 %v1028
      %v1395 = vunpack.c.l.b16 %v1029
      %v1396 = vunpack.c.h.b16 %v1029
      %v1397 = vunpack.c.l.b16 %v1030
      %v1398 = vunpack.c.h.b16 %v1030
      %v1399 = vunpack.c.l.b16 %v1031
      %v1400 = vunpack.c.h.b16 %v1031
      %v1401 = vunpack.c.l.b16 %v1032
      %v1402 = vunpack.c.h.b16 %v1032
      %v1403 = vunpack.c.l.b16 %v1033
      %v1404 = vunpack.c.h.b16 %v1033
      %v1405 = vunpack.c.l.b16 %v1034
      %v1406 = vunpack.c.h.b16 %v1034
      %v1407 = vunpack.c.l.b16 %v1035
      %v1408 = vunpack.c.h.b16 %v1035
      %v1409 = vunpack.c.l.b16 %v1036
      %v1410 = vunpack.c.h.b16 %v1036
      %v1411 = vunpack.c.l.b16 %v1037
      %v1412 = vunpack.c.h.b16 %v1037
      %v1413 = vunpack.c.l.b16 %v1038
      %v1414 = vunpack.c.h.b16 %v1038
      %v1415 = vunpack.c.l.b16 %v1039
      %v1416 = vunpack.c.h.b16 %v1039
      %v1417 = vunpack.c.l.b16 %v1040
      %v1418 = vunpack.c.h.b16 %v1040
      %v1419 = vunpack.c.l.b16 %v1041
      %v1420 = vunpack.c.h.b16 %v1041
      %v1421 = vunpack.c.l.b16 %v1042
      %v1422 = vunpack.c.h.b16 %v1042
      %v1423 = vunpack.c.l.b16 %v1043
      %v1424 = vunpack.c.h.b16 %v1043
      %v1425 = vunpack.c.l.b16 %v1044
      %v1426 = vunpack.c.h.b16 %v1044
      %v1427 = vunpack.c.l.b16 %v1045
      %v1428 = vunpack.c.h.b16 %v1045
      %v1429 = vunpack.c.l.b16 %v1046
      %v1430 = vunpack.c.h.b16 %v1046
      %v1431 = vpack.c.b16 %v1183, %v1175
      %v1432 = vpack.c.b16 %v1184, %v1176
      %v1433 = vpack.c.b16 %v1185, %v1177
      %v1434 = vpack.c.b16 %v1186, %v1178
      %v1435 = vpack.c.b16 %v1187, %v1179
      %v1436 = vpack.c.b16 %v1188, %v1180
      %v1437 = vpack.c.b16 %v1189, %v1181
      %v1438 = vpack.c.b16 %v1190, %v1182
      %v1439 = vpack.c.b16 %v1199, %v1191
      %v1440 = vpack.c.b16 %v1200, %v1192
      %v1441 = vpack.c.b16 %v1201, %v1193
      %v1442 = vpack.c.b16 %v1202, %v1194
      %v1443 = vpack.c.b16 %v1203, %v1195
      %v1444 = vpack.c.b16 %v1204, %v1196
      %v1445 = vpack.c.b16 %v1205, %v1197
      %v1446 = vpack.c.b16 %v1206, %v1198
      %v1447 = vpack.c.b16 %v1215, %v1207
      %v1448 = vpack.c.b16 %v1216, %v1208
      %v1449 = vpack.c.b16 %v1217, %v1209
      %v1450 = vpack.c.b16 %v1218, %v1210
      %v1451 = vpack.c.b16 %v1219, %v1211
      %v1452 = vpack.c.b16 %v1220, %v1212
      %v1453 = vpack.c.b16 %v1221, %v1213
      %v1454 = vpack.c.b16 %v1222, %v1214
      %v1455 = vpack.c.b16 %v1231, %v1223
      %v1456 = vpack.c.b16 %v1232, %v1224
      %v1457 = vpack.c.b16 %v1233, %v1225
      %v1458 = vpack.c.b16 %v1234, %v1226
      %v1459 = vpack.c.b16 %v1235, %v1227
      %v1460 = vpack.c.b16 %v1236, %v1228
      %v1461 = vpack.c.b16 %v1237, %v1229
      %v1462 = vpack.c.b16 %v1238, %v1230
      %v1463 = vpack.c.b16 %v1247, %v1239
      %v1464 = vpack.c.b16 %v1248, %v1240
      %v1465 = vpack.c.b16 %v1249, %v1241
      %v1466 = vpack.c.b16 %v1250, %v1242
      %v1467 = vpack.c.b16 %v1251, %v1243
      %v1468 = vpack.c.b16 %v1252, %v1244
      %v1469 = vpack.c.b16 %v1253, %v1245
      %v1470 = vpack.c.b16 %v1254, %v1246
      %v1471 = vpack.c.b16 %v1263, %v1255
      %v1472 = vpack.c.b16 %v1264, %v1256
      %v1473 = vpack.c.b16 %v1265, %v1257
      %v1474 = vpack.c.b16 %v1266, %v1258
      %v1475 = vpack.c.b16 %v1267, %v1259
      %v1476 = vpack.c.b16 %v1268, %v1260
      %v1477 = vpack.c.b16 %v1269, %v1261
      %v1478 = vpack.c.b16 %v1270, %v1262
      %v1479 = vpack.c.b16 %v1279, %v1271
      %v1480 = vpack.c.b16 %v1280, %v1272
      %v1481 = vpack.c.b16 %v1281, %v1273
      %v1482 = vpack.c.b16 %v1282, %v1274
      %v1483 = vpack.c.b16 %v1283, %v1275
      %v1484 = vpack.c.b16 %v1284, %v1276
      %v1485 = vpack.c.b16 %v1285, %v1277
      %v1486 = vpack.c.b16 %v1286, %v1278
      %v1487 = vpack.c.b16 %v1295, %v1287
      %v1488 = vpack.c.b16 %v1296, %v1288
      %v1489 = vpack.c.b16 %v1297, %v1289
      %v1490 = vpack.c.b16 %v1298, %v1290
      %v1491 = vpack.c.b16 %v1299, %v1291
      %v1492 = vpack.c.b16 %v1300, %v1292
      %v1493 = vpack.c.b16 %v1301, %v1293
      %v1494 = vpack.c.b16 %v1302, %v1294
      %v1495 = vpack.c.b16 %v1311, %v1303
      %v1496 = vpack.c.b16 %v1312, %v1304
      %v1497 = vpack.c.b16 %v1313, %v1305
      %v1498 = vpack.c.b16 %v1314, %v1306
      %v1499 = vpack.c.b16 %v1315, %v1307
      %v1500 = vpack.c.b16 %v1316, %v1308
      %v1501 = vpack.c.b16 %v1317, %v1309
      %v1502 = vpack.c.b16 %v1318, %v1310
      %v1503 = vpack.c.b16 %v1327, %v1319
      %v1504 = vpack.c.b16 %v1328, %v1320
      %v1505 = vpack.c.b16 %v1329, %v1321
      %v1506 = vpack.c.b16 %v1330, %v1322
      %v1507 = vpack.c.b16 %v1331, %v1323
      %v1508 = vpack.c.b16 %v1332, %v1324
      %v1509 = vpack.c.b16 %v1333, %v1325
      %v1510 = vpack.c.b16 %v1334, %v1326
      %v1511 = vpack.c.b16 %v1343, %v1335
      %v1512 = vpack.c.b16 %v1344, %v1336
      %v1513 = vpack.c.b16 %v1345, %v1337
      %v1514 = vpack.c.b16 %v1346, %v1338
      %v1515 = vpack.c.b16 %v1347, %v1339
      %v1516 = vpack.c.b16 %v1348, %v1340
      %v1517 = vpack.c.b16 %v1349, %v1341
      %v1518 = vpack.c.b16 %v1350, %v1342
      %v1519 = vpack.c.b16 %v1359, %v1351
      %v1520 = vpack.c.b16 %v1360, %v1352
      %v1521 = vpack.c.b16 %v1361, %v1353
      %v1522 = vpack.c.b16 %v1362, %v1354
      %v1523 = vpack.c.b16 %v1363, %v1355
      %v1524 = vpack.c.b16 %v1364, %v1356
      %v1525 = vpack.c.b16 %v1365, %v1357
      %v1526 = vpack.c.b16 %v1366, %v1358
      %v1527 = vpack.c.b16 %v1375, %v1367
      %v1528 = vpack.c.b16 %v1376, %v1368
      %v1529 = vpack.c.b16 %v1377, %v1369
      %v1530 = vpack.c.b16 %v1378, %v1370
      %v1531 = vpack.c.b16 %v1379, %v1371
      %v1532 = vpack.c.b16 %v1380, %v1372
      %v1533 = vpack.c.b16 %v1381, %v1373
      %v1534 = vpack.c.b16 %v1382, %v1374
      %v1535 = vpack.c.b16 %v1391, %v1383
      %v1536 = vpack.c.b16 %v1392, %v1384
      %v1537 = vpack.c.b16 %v1393, %v1385
      %v1538 = vpack.c.b16 %v1394, %v1386
      %v1539 = vpack.c.b16 %v1395, %v1387
      %v1540 = vpack.c.b16 %v1396, %v1388
      %v1541 = vpack.c.b16 %v1397, %v1389
      %v1542 = vpack.c.b16 %v1398, %v1390
      %v1543 = vpack.c.b16 %v1407, %v1399
      %v1544 = vpack.c.b16 %v1408, %v1400
      %v1545 = vpack.c.b16 %v1409, %v1401
      %v1546 = vpack.c.b16 %v1410, %v1402
      %v1547 = vpack.c.b16 %v1411, %v1403
      %v1548 = vpack.c.b16 %v1412, %v1404
      %v1549 = vpack.c.b16 %v1413, %v1405
      %v1550 = vpack.c.b16 %v1414, %v1406
      %v1551 = vpack.c.b16 %v1423, %v1415
      %v1552 = vpack.c.b16 %v1424, %v1416
      %v1553 = vpack.c.b16 %v1425, %v1417
      %v1554 = vpack.c.b16 %v1426, %v1418
      %v1555 = vpack.c.b16 %v1427, %v1419
      %v1556 = vpack.c.b16 %v1428, %v1420
      %v1557 = vpack.c.b16 %v1429, %v1421
      %v1558 = vpack.c.b16 %v1430, %v1422
      %1687 = vmatprep.subr.bf16.mxu0 %v1432
      %1688 = vmatpush1.bf16.msra.mxu0 %v1431
      %1689 = vmatprep.subr.bf16.mxu0 %v1440
      %1690 = vmatpush1.bf16.msra.mxu0 %v1439
      %1691 = vmatprep.subr.bf16.mxu0 %v1448
      %1692 = vmatpush1.bf16.msra.mxu0 %v1447
      %1693 = vmatprep.subr.bf16.mxu0 %v1456
      %1694 = vmatpush1.bf16.msra.mxu0 %v1455
      %1695 = vmatprep.subr.bf16.mxu0 %v1464
      %1696 = vmatpush1.bf16.msra.mxu0 %v1463
      %1697 = vmatprep.subr.bf16.mxu0 %v1472
      %1698 = vmatpush1.bf16.msra.mxu0 %v1471
      %1699 = vmatprep.subr.bf16.mxu0 %v1480
      %1700 = vmatpush1.bf16.msra.mxu0 %v1479
      %1701 = vmatprep.subr.bf16.mxu0 %v1488
      %1702 = vmatpush1.bf16.msra.mxu0 %v1487
      %1703 = vmatprep.subr.bf16.mxu0 %v1496
      %1704 = vmatpush1.bf16.msra.mxu0 %v1495
      %1705 = vmatprep.subr.bf16.mxu0 %v1504
      %1706 = vmatpush1.bf16.msra.mxu0 %v1503
      %1707 = vmatprep.subr.bf16.mxu0 %v1512
      %1708 = vmatpush1.bf16.msra.mxu0 %v1511
      %1709 = vmatprep.subr.bf16.mxu0 %v1520
      %1710 = vmatpush1.bf16.msra.mxu0 %v1519
      %1711 = vmatprep.subr.bf16.mxu0 %v1528
      %1712 = vmatpush1.bf16.msra.mxu0 %v1527
      %1713 = vmatprep.subr.bf16.mxu0 %v1536
      %1714 = vmatpush1.bf16.msra.mxu0 %v1535
      %1715 = vmatprep.subr.bf16.mxu0 %v1544
      %1716 = vmatpush1.bf16.msra.mxu0 %v1543
      %1717 = vmatprep.subr.bf16.mxu0 %v1552
      %1718 = vmatpush1.bf16.msra.mxu0 %v1551
      %1719 = vmatprep.mubr.bf16.mxu0 %v918
      %1720 = vmatmul.mubr.bf16.gmra.mrb[0].mxu0 %v917
      %v1721 = vpop.f32.mrb[0].mxu0
      %v1722 = vadd.f32 0.0, %v1721
      %v1723 = vpop.f32.mrb[0].mxu0
      %v1724 = vadd.f32 0.0, %v1723
      %v1725 = vpop.f32.mrb[0].mxu0
      %v1726 = vpop.f32.mrb[0].mxu0
      %1727 = vdwg.mxu0
      %1728 = vmatprep.subr.bf16.mxu0 %v1434
      %1729 = vmatpush1.bf16.msra.mxu0 %v1433
      %1730 = vmatprep.subr.bf16.mxu0 %v1442
      %1731 = vmatpush1.bf16.msra.mxu0 %v1441
      %1732 = vmatprep.subr.bf16.mxu0 %v1450
      %1733 = vmatpush1.bf16.msra.mxu0 %v1449
      %1734 = vmatprep.subr.bf16.mxu0 %v1458
      %1735 = vmatpush1.bf16.msra.mxu0 %v1457
      %1736 = vmatprep.subr.bf16.mxu0 %v1466
      %1737 = vmatpush1.bf16.msra.mxu0 %v1465
      %1738 = vmatprep.subr.bf16.mxu0 %v1474
      %1739 = vmatpush1.bf16.msra.mxu0 %v1473
      %1740 = vmatprep.subr.bf16.mxu0 %v1482
      %1741 = vmatpush1.bf16.msra.mxu0 %v1481
      %1742 = vmatprep.subr.bf16.mxu0 %v1490
      %1743 = vmatpush1.bf16.msra.mxu0 %v1489
      %1744 = vmatprep.subr.bf16.mxu0 %v1498
      %1745 = vmatpush1.bf16.msra.mxu0 %v1497
      %1746 = vmatprep.subr.bf16.mxu0 %v1506
      %1747 = vmatpush1.bf16.msra.mxu0 %v1505
      %1748 = vmatprep.subr.bf16.mxu0 %v1514
      %1749 = vmatpush1.bf16.msra.mxu0 %v1513
      %1750 = vmatprep.subr.bf16.mxu0 %v1522
      %1751 = vmatpush1.bf16.msra.mxu0 %v1521
      %1752 = vmatprep.subr.bf16.mxu0 %v1530
      %1753 = vmatpush1.bf16.msra.mxu0 %v1529
      %1754 = vmatprep.subr.bf16.mxu0 %v1538
      %1755 = vmatpush1.bf16.msra.mxu0 %v1537
      %1756 = vmatprep.subr.bf16.mxu0 %v1546
      %1757 = vmatpush1.bf16.msra.mxu0 %v1545
      %1758 = vmatprep.subr.bf16.mxu0 %v1554
      %1759 = vmatpush1.bf16.msra.mxu0 %v1553
      %1760 = vmatprep.mubr.bf16.mxu0 %v918
      %1761 = vmatmul.mubr.bf16.gmra.mrb[0].mxu0 %v917
      %v1762 = vpop.f32.mrb[0].mxu0
      %v1763 = vadd.f32 0.0, %v1762
      %v1764 = vpop.f32.mrb[0].mxu0
      %v1765 = vadd.f32 0.0, %v1764
      %v1766 = vpop.f32.mrb[0].mxu0
      %v1767 = vpop.f32.mrb[0].mxu0
      %1768 = vdwg.mxu0
      %1769 = vmatprep.subr.bf16.mxu0 %v1436
      %1770 = vmatpush1.bf16.msra.mxu0 %v1435
      %1771 = vmatprep.subr.bf16.mxu0 %v1444
      %1772 = vmatpush1.bf16.msra.mxu0 %v1443
      %1773 = vmatprep.subr.bf16.mxu0 %v1452
      %1774 = vmatpush1.bf16.msra.mxu0 %v1451
      %1775 = vmatprep.subr.bf16.mxu0 %v1460
      %1776 = vmatpush1.bf16.msra.mxu0 %v1459
      %1777 = vmatprep.subr.bf16.mxu0 %v1468
      %1778 = vmatpush1.bf16.msra.mxu0 %v1467
      %1779 = vmatprep.subr.bf16.mxu0 %v1476
      %1780 = vmatpush1.bf16.msra.mxu0 %v1475
      %1781 = vmatprep.subr.bf16.mxu0 %v1484
      %1782 = vmatpush1.bf16.msra.mxu0 %v1483
      %1783 = vmatprep.subr.bf16.mxu0 %v1492
      %1784 = vmatpush1.bf16.msra.mxu0 %v1491
      %1785 = vmatprep.subr.bf16.mxu0 %v1500
      %1786 = vmatpush1.bf16.msra.mxu0 %v1499
      %1787 = vmatprep.subr.bf16.mxu0 %v1508
      %1788 = vmatpush1.bf16.msra.mxu0 %v1507
      %1789 = vmatprep.subr.bf16.mxu0 %v1516
      %1790 = vmatpush1.bf16.msra.mxu0 %v1515
      %1791 = vmatprep.subr.bf16.mxu0 %v1524
      %1792 = vmatpush1.bf16.msra.mxu0 %v1523
      %1793 = vmatprep.subr.bf16.mxu0 %v1532
      %1794 = vmatpush1.bf16.msra.mxu0 %v1531
      %1795 = vmatprep.subr.bf16.mxu0 %v1540
      %1796 = vmatpush1.bf16.msra.mxu0 %v1539
      %1797 = vmatprep.subr.bf16.mxu0 %v1548
      %1798 = vmatpush1.bf16.msra.mxu0 %v1547
      %1799 = vmatprep.subr.bf16.mxu0 %v1556
      %1800 = vmatpush1.bf16.msra.mxu0 %v1555
      %1801 = vmatprep.mubr.bf16.mxu0 %v918
      %1802 = vmatmul.mubr.bf16.gmra.mrb[0].mxu0 %v917
      %v1803 = vpop.f32.mrb[0].mxu0
      %v1804 = vadd.f32 0.0, %v1803
      %v1805 = vpop.f32.mrb[0].mxu0
      %v1806 = vadd.f32 0.0, %v1805
      %v1807 = vpop.f32.mrb[0].mxu0
      %v1808 = vpop.f32.mrb[0].mxu0
      %1809 = vdwg.mxu0
      %1810 = vmatprep.subr.bf16.mxu0 %v1438
      %1811 = vmatpush1.bf16.msra.mxu0 %v1437
      %1812 = vmatprep.subr.bf16.mxu0 %v1446
      %1813 = vmatpush1.bf16.msra.mxu0 %v1445
      %1814 = vmatprep.subr.bf16.mxu0 %v1454
      %1815 = vmatpush1.bf16.msra.mxu0 %v1453
      %1816 = vmatprep.subr.bf16.mxu0 %v1462
      %1817 = vmatpush1.bf16.msra.mxu0 %v1461
      %1818 = vmatprep.subr.bf16.mxu0 %v1470
      %1819 = vmatpush1.bf16.msra.mxu0 %v1469
      %1820 = vmatprep.subr.bf16.mxu0 %v1478
      %1821 = vmatpush1.bf16.msra.mxu0 %v1477
      %1822 = vmatprep.subr.bf16.mxu0 %v1486
      %1823 = vmatpush1.bf16.msra.mxu0 %v1485
      %1824 = vmatprep.subr.bf16.mxu0 %v1494
      %1825 = vmatpush1.bf16.msra.mxu0 %v1493
      %1826 = vmatprep.subr.bf16.mxu0 %v1502
      %1827 = vmatpush1.bf16.msra.mxu0 %v1501
      %1828 = vmatprep.subr.bf16.mxu0 %v1510
      %1829 = vmatpush1.bf16.msra.mxu0 %v1509
      %1830 = vmatprep.subr.bf16.mxu0 %v1518
      %1831 = vmatpush1.bf16.msra.mxu0 %v1517
      %1832 = vmatprep.subr.bf16.mxu0 %v1526
      %1833 = vmatpush1.bf16.msra.mxu0 %v1525
      %1834 = vmatprep.subr.bf16.mxu0 %v1534
      %1835 = vmatpush1.bf16.msra.mxu0 %v1533
      %1836 = vmatprep.subr.bf16.mxu0 %v1542
      %1837 = vmatpush1.bf16.msra.mxu0 %v1541
      %1838 = vmatprep.subr.bf16.mxu0 %v1550
      %1839 = vmatpush1.bf16.msra.mxu0 %v1549
      %1840 = vmatprep.subr.bf16.mxu0 %v1558
      %1841 = vmatpush1.bf16.msra.mxu0 %v1557
      %1842 = vmatprep.mubr.bf16.mxu0 %v918
      %1843 = vmatmul.mubr.bf16.gmra.mrb[0].mxu0 %v917
      %v1844 = vpop.f32.mrb[0].mxu0
      %v1845 = vadd.f32 0.0, %v1844
      %v1846 = vpop.f32.mrb[0].mxu0
      %v1847 = vadd.f32 0.0, %v1846
      %v1848 = vpop.f32.mrb[0].mxu0
      %v1849 = vpop.f32.mrb[0].mxu0
      %1850 = vdwg.mxu0
      %s1851 = sshra.s32 %s910, 3
      %s1852 = sand.u32 %s910, 7
      %s1853 = smul.u32 %s1851, 4
      %s1854 = smul.addr %s1853, 8
      %s1855 = scalar_lea.vmem [#allocation2], %s1854
      %v1856 = vld [vmem:[%s1855] sm:$0xff]
      %v1857 = vld [vmem:[%s1855 + $0x8] sm:$0xff]
      %v1858 = vld [vmem:[%s1855 + $0x10] sm:$0xff]
      %v1859 = vld [vmem:[%s1855 + $0x18] sm:$0xff]
      %v1860 = vadd.f32 %v1856, %v1722
      %v1861 = vadd.f32 %v1857, %v1724
      %v1862 = vadd.f32 %v1858, %v1763
      %v1863 = vadd.f32 %v1859, %v1765
      %s1864 = sshra.s32 %s912, 3
      %s1865 = sand.u32 %s912, 7
      %s1866 = smul.u32 %s1864, 4
      %s1867 = smul.addr %s1866, 8
      %s1868 = scalar_lea.vmem [#allocation3], %s1867
      %v1869 = vld [vmem:[%s1868] sm:$0xff]
      %v1870 = vld [vmem:[%s1868 + $0x8] sm:$0xff]
      %v1871 = vld [vmem:[%s1868 + $0x10] sm:$0xff]
      %v1872 = vld [vmem:[%s1868 + $0x18] sm:$0xff]
      %v1873 = vadd.f32 %v1869, %v1804
      %v1874 = vadd.f32 %v1870, %v1806
      %v1875 = vadd.f32 %v1871, %v1845
      %v1876 = vadd.f32 %v1872, %v1847
      %v1877 = vxor.u32 %v1860, 2147483648
      %v1878 = vmul.f32 %v1877, 1.442695
      %v1879 = vpow.pop %v1878
      %v1880 = vadd.f32 %v1879, 1.0
      %v1881 = vrcp.pop %v1880
      %v1882 = vmul.f32 1.0, %v1881
      %v1883 = vxor.u32 %v1861, 2147483648
      %v1884 = vmul.f32 %v1883, 1.442695
      %v1885 = vpow.pop %v1884
      %v1886 = vadd.f32 %v1885, 1.0
      %v1887 = vrcp.pop %v1886
      %v1888 = vmul.f32 1.0, %v1887
      %v1889 = vtanh.pop %v1862
      %v1890 = vxor.u32 %v1863, 2147483648
      %v1891 = vmul.f32 %v1890, 1.442695
      %v1892 = vpow.pop %v1891
      %v1893 = vadd.f32 %v1892, 1.0
      %v1894 = vrcp.pop %v1893
      %v1895 = vmul.f32 1.0, %v1894
      %v1896 = vmul.f32 %v1888, %v915
      %v1897 = vmul.f32 %v1882, %v1889
      %v1898 = vadd.f32 %v1896, %v1897
      %v1899 = vtanh.pop %v1898
      %v1900 = vmul.f32 %v1895, %v1899
      %v1901 = vxor.u32 %v1873, 2147483648
      %v1902 = vmul.f32 %v1901, 1.442695
      %v1903 = vpow.pop %v1902
      %v1904 = vadd.f32 %v1903, 1.0
      %v1905 = vrcp.pop %v1904
      %v1906 = vmul.f32 1.0, %v1905
      %v1907 = vxor.u32 %v1874, 2147483648
      %v1908 = vmul.f32 %v1907, 1.442695
      %v1909 = vpow.pop %v1908
      %v1910 = vadd.f32 %v1909, 1.0
      %v1911 = vrcp.pop %v1910
      %v1912 = vmul.f32 1.0, %v1911
      %v1913 = vtanh.pop %v1875
      %v1914 = vxor.u32 %v1876, 2147483648
      %v1915 = vmul.f32 %v1914, 1.442695
      %v1916 = vpow.pop %v1915
      %v1917 = vadd.f32 %v1916, 1.0
      %v1918 = vrcp.pop %v1917
      %v1919 = vmul.f32 1.0, %v1918
      %v1920 = vmul.f32 %v1912, %v916
      %v1921 = vmul.f32 %v1906, %v1913
      %v1922 = vadd.f32 %v1920, %v1921
      %v1923 = vtanh.pop %v1922
      %v1924 = vmul.f32 %v1919, %v1923
      %v1925 = vstv %s908
      %vm1926 = vcmp.gt.s32.totalorder %v900, %v1925
      %v1927 = vstv %s909
      %vm1928 = vcmp.gt.s32.totalorder %v900, %v1927
      %v1929 = vsel %vm1926, 1, 0
      %1930 = vset.pattern.permute.xlu0 0
      %1931 = vperm.xlu0 %1930, %v1929
      %v1932 = vpop.permute.xlu0 %1931
      %vm1933 = vcmp.eq.s32.totalorder %v1932, 1
      %v1934 = vsel %vm1933, %v1900, 0.0
      %v1935 = vpack.c.bf16 %v1934, %v1934
      %s1936 = smul.addr %s1851, 4
      %s1937 = scalar_lea.vmem [#allocation9], %s1936
      %1938 = vst [vmem:[%s1937] sm:$0xf] %v1935
      %v1939 = vsel %vm1928, 1, 0
      %1940 = vset.pattern.permute.xlu0 0
      %1941 = vperm.xlu0 %1940, %v1939
      %v1942 = vpop.permute.xlu0 %1941
      %vm1943 = vcmp.eq.s32.totalorder %v1942, 1
      %v1944 = vsel %vm1943, %v1924, 0.0
      %v1945 = vpack.c.bf16 %v1944, %v1944
      %s1946 = smul.addr %s1864, 4
      %s1947 = scalar_lea.vmem [#allocation10], %s1946
      %1948 = vst [vmem:[%s1947] sm:$0xf] %v1945
      %v1949 = vsel %vm1933, %v1900, %v913
      %1950 = vst [vmem:[#allocation4] sm:$0xff] %v1949
      %v1951 = vsel %vm1933, %v1898, %v915
      %1952 = vst [vmem:[#allocation5] sm:$0xff] %v1951
      %v1953 = vsel %vm1943, %v1924, %v914
      %1954 = vst [vmem:[#allocation4 + $0x8] sm:$0xff] %v1953
      %v1955 = vsel %vm1943, %v1922, %v916
      %1956 = vst [vmem:[#allocation5 + $0x8] sm:$0xff] %v1955
    $region54: #{tpu_custom_call.1} parent=1 // loop_footer
      %s906 = sadd.s32 1, %s902
    $region55: #{tpu_custom_call.1} parent=1 // loop_footer_branch
      %901 = sbr.rel target = $region51
    $region56: #{tpu_custom_call.1} parent=1 // loop_exit
      _
    // Predicated region
    $region57: #{tpu_custom_call.1} parent=1 // pred_check
      _
    $region58: #{tpu_custom_call.1} parent=1 // pred_check_branch
      %1958 = sbr.rel (0) target = $region60
    $region59: #{tpu_custom_call.1} parent=1 // pred_region
      %s1960 = ssub.s32 512, 512
      %1961 = vsyncadd [#allocation8], %s1960
      %s1962 = sshll.u32 [#allocation9], 4
      %s1963 = int_to_ptr.vmem [resolvable:$true] %s1962
      %1968 = dma.vmem_to_hbm [thread:$0]  %s1963, 512, %s10, [#allocation8], 64, 64, 4
    $region60: #{tpu_custom_call.1} parent=1 // pred_fallthru
      _
    // Predicated region
    $region61: #{tpu_custom_call.1} parent=1 // pred_check
      _
    $region62: #{tpu_custom_call.1} parent=1 // pred_check_branch
      %1970 = sbr.rel (0) target = $region64
    $region63: #{tpu_custom_call.1} parent=1 // pred_region
      %s1971 = ssub.s32 0, 0
      %s1972 = smul.u32 8, %s1971
      %s1974 = ssub.s32 512, 512
      %1975 = vsyncadd [#allocation11], %s1974
      %s1976 = smul.addr %s1972, 64
      %s1977 = scalar_lea.hbm %s11, %s1976
      %s1978 = sshll.u32 [#allocation10], 4
      %s1979 = int_to_ptr.vmem [resolvable:$true] %s1978
      %1984 = dma.vmem_to_hbm [thread:$0]  %s1979, 512, %s1977, [#allocation11], 64, 64, 4
    $region64: #{tpu_custom_call.1} parent=1 // pred_fallthru
      _
    // Predicated region
    $region65: #{tpu_custom_call.1} parent=1 // pred_check
      _
    $region66: #{tpu_custom_call.1} parent=1 // pred_check_branch
      %1986 = sbr.rel (0) target = $region68
    $region67: #{tpu_custom_call.1} parent=1 // pred_region
      %1987 = dma.done [#allocation8], 512
    $region68: #{tpu_custom_call.1} parent=1 // pred_fallthru
      _
    // Predicated region
    $region69: #{tpu_custom_call.1} parent=1 // pred_check
      _
    $region70: #{tpu_custom_call.1} parent=1 // pred_check_branch
      %1989 = sbr.rel (0) target = $region72
    $region71: #{tpu_custom_call.1} parent=1 // pred_region
      %1990 = dma.done [#allocation11], 512
    $region72: #{tpu_custom_call.1} parent=1 // pred_fallthru
      _
    %1991 = vsyncpa [#allocation7], 1
    %1992 = vsyncpa [#allocation8], 1
    %1993 = vsyncpa [#allocation11], 1

</llo_original>
